<compile_context>
chip_gen: v7x
topology: tpu7x:2x2x1
jax: 0.10.0
libtpu: 0.0.40
codegen_flags: <defaults>
</compile_context>

<pallas_src>
import numpy as np
import jax
import jax.numpy as jnp
from jax.experimental import pallas as pl
from jax.experimental.pallas import tpu as pltpu

# ----------------------------------------------------------------------------
# Small, self-consistent config (stand-in for model_cfg / data_cfg)
# ----------------------------------------------------------------------------
EMBED_DIM = 32
DOUBLE_EMBED_DIM = 2 * EMBED_DIM
MERGE_DIM = 64
PROJ_DIM = 16
IMG_IN_DIM = 64                      # small stand-in for the 2048-ch backbone
N_TYPE, N_MOTION, N_COLOR, N_SIZE = 3, 4, 7, 2
TYPE_DIM, MOTION_DIM = N_TYPE + 1, N_MOTION + 1
COLOR_DIM, SIZE_DIM = N_COLOR + 1, N_SIZE + 1
TOTAL_VIS_FEATS_DIM = 2 * (N_TYPE + N_COLOR + 2 + PROJ_DIM) + N_SIZE + 3 + N_MOTION
# vis_feats_cat lane order: type1, motion1, color1, size1, proj_car, type2,
#                           color2, proj_mo, inter
HEAD_DIMS = (TYPE_DIM, MOTION_DIM, COLOR_DIM, SIZE_DIM, PROJ_DIM,
             TYPE_DIM, COLOR_DIM, PROJ_DIM, 1)
# first 4 heads (type1/motion1/color1/size1) are multiplied by local_scale
SCALED_LANES = TYPE_DIM + MOTION_DIM + COLOR_DIM + SIZE_DIM
BATCH = 2
SEQ = 8

LN_EPS = 1e-5
BN_EPS = 1e-5
NORM_EPS = 1e-12

# ---- row offsets inside the packed weight stacks (all multiples of 8) -------
W64_DVF = 0                                   # (2*IMG_IN, 2E) block-diag conv
W64_LC = W64_DVF + 2 * IMG_IN_DIM             # (E, 2E) lang_car_fc, lane-padded
W64_LM = W64_LC + EMBED_DIM                   # (E, 2E) lang_mo_fc, lane-padded
W64_LFM1 = W64_LM + EMBED_DIM                 # (2E, 2E) lang_fc_merge linear 1
W64_LFM2 = W64_LFM1 + DOUBLE_EMBED_DIM        # (2E, MERGE) lang_fc_merge linear 2
W64_VFM1 = W64_LFM2 + DOUBLE_EMBED_DIM        # (2E, 2E) vis_fc_merge linear 1
W64_VFM2 = W64_VFM1 + DOUBLE_EMBED_DIM        # (2E, MERGE) vis_fc_merge linear 2
W64_ROWS = W64_VFM2 + DOUBLE_EMBED_DIM        # = 448

W65_HEADS = 0                                 # (2E, F) packed extractor heads
W65_DOWN = W65_HEADS + DOUBLE_EMBED_DIM       # (MERGE, F) lang_feats_down_scale
W65_VFF1 = W65_DOWN + MERGE_DIM               # (F, F) vis_fc_feats linear 1
W65_VFF2 = W65_VFF1 + TOTAL_VIS_FEATS_DIM + ((-TOTAL_VIS_FEATS_DIM) % 8)  # = 200
W65_ROWS = W65_VFF2 + TOTAL_VIS_FEATS_DIM     # = 265

# ---- packed output slab: 9 regions, each 128-lane aligned -------------------
OUT_REGION = 128
OUT_WIDTH = 9 * OUT_REGION


def _vspec():
    return pl.BlockSpec(memory_space=pltpu.MemorySpace.VMEM)


def _sspec():
    return pl.BlockSpec(memory_space=pltpu.MemorySpace.SMEM)


# ----------------------------------------------------------------------------
# Single fused kernel: the whole eval forward in one pallas_call
# ----------------------------------------------------------------------------
def _fused_forward_kernel(
    scale_ref,                       # SMEM (1,)  local_scale
    nl_car_ref, nl_mo_ref,           # (B, SEQ, E) BERT last_hidden_state stand-ins
    img_cm_ref,                      # (B, 2*IMG_IN)  [crops | motion] backbone feats
    w64_ref, w65_ref,                # packed weight stacks
    vecE_ref, vec64_ref, vecF_ref,   # packed bias / LN / folded-BN vectors
    out_ref,                         # (B, OUT_WIDTH) packed output slab
):
    E, D2, F = EMBED_DIM, DOUBLE_EMBED_DIM, TOTAL_VIS_FEATS_DIM
    R = OUT_REGION
    s = scale_ref[0]

    def mm(x, w):
        return jnp.dot(x, w, preferred_element_type=jnp.float32)

    def layer_norm(x, g, b):
        mu = jnp.mean(x, axis=-1, keepdims=True)
        var = jnp.mean((x - mu) ** 2, axis=-1, keepdims=True)
        return (x - mu) * jax.lax.rsqrt(var + LN_EPS) * g + b

    def l2norm(x):
        n = jnp.sqrt(jnp.sum(x * x, axis=-1, keepdims=True))
        return x / jnp.maximum(n, NORM_EPS)        # F.normalize(p=2, eps=1e-12)

    # ---- text branch: mean over seq -> LayerNorm -> ReLU -> Linear ----------
    # lang_cm = [lang_car_embeds | lang_motion_embeds] via lane-padded weights
    r_car = jnp.maximum(
        layer_norm(jnp.mean(nl_car_ref[...], axis=1), vecE_ref[0:1, :], vecE_ref[1:2, :]), 0.0)
    r_mo = jnp.maximum(
        layer_norm(jnp.mean(nl_mo_ref[...], axis=1), vecE_ref[2:3, :], vecE_ref[3:4, :]), 0.0)
    lang_cm = (mm(r_car, w64_ref[W64_LC:W64_LC + E, :])
               + mm(r_mo, w64_ref[W64_LM:W64_LM + E, :])
               + vec64_ref[1:2, :])                                     # (B, 2E)

    # ---- visual trunk: block-diag 1x1-conv over [crops | motion] ------------
    vis_cm = (mm(img_cm_ref[...], w64_ref[W64_DVF:W64_DVF + 2 * IMG_IN_DIM, :])
              + vec64_ref[0:1, :])                                      # (B, 2E)

    # ---- packed extractor heads: one (2E, F) matmul in vis_feats_cat order --
    heads_raw = mm(vis_cm, w65_ref[W65_HEADS:W65_HEADS + D2, :]) + vecF_ref[0:1, :]
    lane = jax.lax.broadcasted_iota(jnp.int32, heads_raw.shape, 1)
    vis_feats_cat = jnp.where(lane < SCALED_LANES, s * heads_raw, heads_raw)

    # ---- lang_fc_merge: LN(cat) -> Linear -> ReLU -> Linear, then down-scale -
    h = layer_norm(lang_cm, vec64_ref[2:3, :], vec64_ref[3:4, :])
    h = jnp.maximum(mm(h, w64_ref[W64_LFM1:W64_LFM1 + D2, :]) + vec64_ref[4:5, :], 0.0)
    lang_merge_embeds = mm(h, w64_ref[W64_LFM2:W64_LFM2 + D2, :]) + vec64_ref[5:6, :]
    lang_merge_feats = (mm(lang_merge_embeds, w65_ref[W65_DOWN:W65_DOWN + MERGE_DIM, :])
                        + vecF_ref[1:2, :])

    # ---- vis_fc_merge: Linear(cat) -> BN(eval, folded) -> ReLU -> Linear ----
    h = mm(vis_cm, w64_ref[W64_VFM1:W64_VFM1 + D2, :]) + vec64_ref[6:7, :]
    h = jnp.maximum(h * vec64_ref[7:8, :] + vec64_ref[8:9, :], 0.0)
    visual_merge_embeds = mm(h, w64_ref[W64_VFM2:W64_VFM2 + D2, :]) + vec64_ref[9:10, :]

    # ---- vis_fc_feats: Linear -> BN(eval, folded) -> ReLU -> Linear ----------
    h = mm(vis_feats_cat, w65_ref[W65_VFF1:W65_VFF1 + F, :]) + vecF_ref[2:3, :]
    h = jnp.maximum(h * vecF_ref[3:4, :] + vecF_ref[4:5, :], 0.0)
    visual_merge_feats = mm(h, w65_ref[W65_VFF2:W65_VFF2 + F, :]) + vecF_ref[5:6, :]

    # ---- fused L2 norms, single lane-packed output slab (aligned regions) ----
    out_ref[...] = jnp.zeros(out_ref.shape, out_ref.dtype)
    out_ref[:, 0 * R:0 * R + E] = l2norm(vis_cm[:, :E])          # visual_car
    out_ref[:, 1 * R:1 * R + E] = l2norm(lang_cm[:, :E])         # lang_car
    out_ref[:, 2 * R:2 * R + E] = l2norm(vis_cm[:, E:D2])        # visual_mo
    out_ref[:, 3 * R:3 * R + E] = l2norm(lang_cm[:, E:D2])       # lang_mo
    out_ref[:, 4 * R:4 * R + F] = l2norm(visual_merge_feats)
    out_ref[:, 5 * R:5 * R + F] = l2norm(lang_merge_feats)
    out_ref[:, 6 * R:6 * R + MERGE_DIM] = l2norm(visual_merge_embeds)
    out_ref[:, 7 * R:7 * R + MERGE_DIM] = l2norm(lang_merge_embeds)
    out_ref[:, 8 * R:8 * R + F] = heads_raw                      # unweighted heads


# ----------------------------------------------------------------------------
# Forward wrapper (eval mode, HEAD.CAT_TRAIN = True) — one pallas_call total
# ----------------------------------------------------------------------------
def siamese_forward(kp, nl_mo_hidden, nl_car_hidden, crops_backbone, motion_backbone):
    B = crops_backbone.shape[0]
    E, F, R = EMBED_DIM, TOTAL_VIS_FEATS_DIM, OUT_REGION
    # NCHW (B, C, 1, 1) -> (B, C); 1x1 conv == dense matmul over channels.
    crops_flat = crops_backbone.reshape(B, -1)
    motion_flat = motion_backbone.reshape(B, -1)
    img_cm = jnp.concatenate([crops_flat, motion_flat], axis=-1)    # (B, 2*IMG_IN)

    packed = pl.pallas_call(
        _fused_forward_kernel,
        out_shape=jax.ShapeDtypeStruct((B, OUT_WIDTH), jnp.float32),
        in_specs=[_sspec()] + [_vspec()] * 8,
        out_specs=_vspec(),
    )(kp['local_scale_smem'], nl_car_hidden, nl_mo_hidden, img_cm,
      kp['w64'], kp['w65'], kp['vecE'], kp['vec64'], kp['vecF'])

    sl = lambda r, w: packed[:, r * R: r * R + w]
    vcar_n, lcar_n, vmo_n, lmo_n = sl(0, E), sl(1, E), sl(2, E), sl(3, E)
    vmf_n, lmf_n = sl(4, F), sl(5, F)
    vme_n, lme_n = sl(6, MERGE_DIM), sl(7, MERGE_DIM)
    heads_raw = sl(8, F)

    # slice the lane-dense head slab into the 9 unweighted projections
    vis_features, off = [], 0
    for d in HEAD_DIMS:
        vis_features.append(heads_raw[:, off:off + d])
        off += d

    return {
        'pairs': [
            (vcar_n, lcar_n),
            (vmo_n, lmo_n),
            (vmf_n, lmf_n),
            (vme_n, lme_n),
        ],
        'logit_scale': kp['logit_scale'],
        'cls_logits': [],          # eval mode -> id-classification heads skipped
        'vis_features': vis_features,
    }


# ----------------------------------------------------------------------------
# Deterministic parameter init (synthetic, matches __init__ shapes)
# ----------------------------------------------------------------------------
def _dense(key, fan_in, fan_out):
    kw, kb = jax.random.split(key)
    bound = 1.0 / np.sqrt(fan_in)
    w = jax.random.uniform(kw, (fan_in, fan_out), jnp.float32, -bound, bound)
    b = jax.random.uniform(kb, (fan_out,), jnp.float32, -bound, bound)
    return w, b


def init_params(key):
    keys = iter(jax.random.split(key, 24))
    E, D2, F = EMBED_DIM, DOUBLE_EMBED_DIM, TOTAL_VIS_FEATS_DIM
    p = {}
    # domian_vis_fc (1x1 conv over 1x1 spatial == Linear(IMG_IN, E))
    p['dvf_w'], p['dvf_b'] = _dense(next(keys), IMG_IN_DIM, E)
    p['dvf_bk_w'], p['dvf_bk_b'] = _dense(next(keys), IMG_IN_DIM, E)
    # lang_car_fc / lang_mo_fc : LayerNorm(E) -> ReLU -> Linear(E,E)
    for name in ('lang_car', 'lang_mo'):
        p[f'{name}_ln_g'] = jnp.ones((E,), jnp.float32)
        p[f'{name}_ln_b'] = jnp.zeros((E,), jnp.float32)
        p[f'{name}_w'], p[f'{name}_b'] = _dense(next(keys), E, E)
    # extractor heads (USE_NON_LINEAR_PROJ = False -> plain Linear)
    p['t1_w'], p['t1_b'] = _dense(next(keys), E, TYPE_DIM)
    p['t2_w'], p['t2_b'] = _dense(next(keys), E, TYPE_DIM)
    p['m1_w'], p['m1_b'] = _dense(next(keys), E, MOTION_DIM)
    p['c1_w'], p['c1_b'] = _dense(next(keys), E, COLOR_DIM)
    p['c2_w'], p['c2_b'] = _dense(next(keys), E, COLOR_DIM)
    p['s1_w'], p['s1_b'] = _dense(next(keys), E, SIZE_DIM)
    p['inter_w'], p['inter_b'] = _dense(next(keys), E, 1)
    p['pcar_w'], p['pcar_b'] = _dense(next(keys), E, PROJ_DIM)
    p['pmo_w'], p['pmo_b'] = _dense(next(keys), E, PROJ_DIM)
    # lang_feats_down_scale : Linear(MERGE_DIM, TOTAL_VIS_FEATS_DIM)
    p['down_w'], p['down_b'] = _dense(next(keys), MERGE_DIM, F)
    # vis_fc_merge : Linear(2E,2E) -> BN(2E) -> ReLU -> Linear(2E, MERGE)
    p['vfm_w1'], p['vfm_b1'] = _dense(next(keys), D2, D2)
    p['vfm_bn_g'] = jnp.ones((D2,), jnp.float32)
    p['vfm_bn_b'] = jnp.zeros((D2,), jnp.float32)
    p['vfm_bn_m'] = jnp.zeros((D2,), jnp.float32)
    p['vfm_bn_v'] = jnp.ones((D2,), jnp.float32)
    p['vfm_w2'], p['vfm_b2'] = _dense(next(keys), D2, MERGE_DIM)
    # lang_fc_merge : LN(2E) -> Linear(2E,2E) -> ReLU -> Linear(2E, MERGE)
    p['lfm_ln_g'] = jnp.ones((D2,), jnp.float32)
    p['lfm_ln_b'] = jnp.zeros((D2,), jnp.float32)
    p['lfm_w1'], p['lfm_b1'] = _dense(next(keys), D2, D2)
    p['lfm_w2'], p['lfm_b2'] = _dense(next(keys), D2, MERGE_DIM)
    # vis_fc_feats : Linear(F,F) -> BN(F) -> ReLU -> Linear(F,F)
    p['vff_w1'], p['vff_b1'] = _dense(next(keys), F, F)
    p['vff_bn_g'] = jnp.ones((F,), jnp.float32)
    p['vff_bn_b'] = jnp.zeros((F,), jnp.float32)
    p['vff_bn_m'] = jnp.zeros((F,), jnp.float32)
    p['vff_bn_v'] = jnp.ones((F,), jnp.float32)
    p['vff_w2'], p['vff_b2'] = _dense(next(keys), F, F)
    # scalar parameters (init = ones, per __init__)
    p['logit_scale'] = jnp.ones((), jnp.float32)
    p['local_scale'] = jnp.ones((), jnp.float32)
    return p


def prepare_kernel_params(p):
    """One-time packing / folding into the kernel's 9 operand arrays."""
    E, D2, F = EMBED_DIM, DOUBLE_EMBED_DIM, TOTAL_VIS_FEATS_DIM
    assert MERGE_DIM == D2, "weight packing assumes MERGE_DIM == 2*EMBED_DIM"
    zE = lambda d: jnp.zeros((E, d), jnp.float32)
    zI = lambda d: jnp.zeros((IMG_IN_DIM, d), jnp.float32)

    def fold_bn(g, b, m, v):                       # BN eval -> per-feature affine
        a = g / jnp.sqrt(v + BN_EPS)
        return a, b - m * a

    # block-diag 1x1-conv weight over lane-concatenated [crops | motion]
    dvf_bd = jnp.concatenate(
        [jnp.concatenate([p['dvf_w'], zI(E)], axis=1),
         jnp.concatenate([zI(E), p['dvf_bk_w']], axis=1)], axis=0)      # (2*IMG_IN, 2E)
    # lang_car_fc / lang_mo_fc weights lane-padded into the [car | mo] slab
    lc_w_pad = jnp.concatenate([p['lang_car_w'], zE(E)], axis=1)        # (E, 2E)
    lm_w_pad = jnp.concatenate([zE(E), p['lang_mo_w']], axis=1)         # (E, 2E)
    # 9 extractor heads packed into one (2E, F) matrix, vis_feats_cat lane order
    heads_car = jnp.concatenate(
        [p['t1_w'], zE(MOTION_DIM), p['c1_w'], p['s1_w'], p['pcar_w'],
         zE(TYPE_DIM + COLOR_DIM + PROJ_DIM + 1)], axis=1)
    heads_mo = jnp.concatenate(
        [zE(TYPE_DIM), p['m1_w'], zE(COLOR_DIM + SIZE_DIM + PROJ_DIM),
         p['t2_w'], p['c2_w'], p['pmo_w'], p['inter_w']], axis=1)
    heads_w = jnp.concatenate([heads_car, heads_mo], axis=0)            # (2E, F)

    w64 = jnp.concatenate([dvf_bd, lc_w_pad, lm_w_pad,
                           p['lfm_w1'], p['lfm_w2'],
                           p['vfm_w1'], p['vfm_w2']], axis=0)
    assert w64.shape == (W64_ROWS, D2)

    pad_f = jnp.zeros(((-F) % 8, F), jnp.float32)   # keep row offsets 8-aligned
    w65 = jnp.concatenate([heads_w, p['down_w'], p['vff_w1'], pad_f, p['vff_w2']],
                          axis=0)
    assert w65.shape == (W65_ROWS, F)

    vfm_a, vfm_c = fold_bn(p['vfm_bn_g'], p['vfm_bn_b'], p['vfm_bn_m'], p['vfm_bn_v'])
    vff_a, vff_c = fold_bn(p['vff_bn_g'], p['vff_bn_b'], p['vff_bn_m'], p['vff_bn_v'])

    vecE = jnp.stack([p['lang_car_ln_g'], p['lang_car_ln_b'],
                      p['lang_mo_ln_g'], p['lang_mo_ln_b']])            # (4, E)
    vec64 = jnp.stack([jnp.concatenate([p['dvf_b'], p['dvf_bk_b']]),
                       jnp.concatenate([p['lang_car_b'], p['lang_mo_b']]),
                       p['lfm_ln_g'], p['lfm_ln_b'], p['lfm_b1'], p['lfm_b2'],
                       p['vfm_b1'], vfm_a, vfm_c, p['vfm_b2']])         # (10, 2E)
    heads_b = jnp.concatenate([p['t1_b'], p['m1_b'], p['c1_b'], p['s1_b'],
                               p['pcar_b'], p['t2_b'], p['c2_b'],
                               p['pmo_b'], p['inter_b']])
    vecF = jnp.stack([heads_b, p['down_b'], p['vff_b1'], vff_a, vff_c, p['vff_b2']])

    return {
        'local_scale_smem': p['local_scale'].reshape(1).astype(jnp.float32),
        'logit_scale': p['logit_scale'],
        'w64': w64, 'w65': w65, 'vecE': vecE, 'vec64': vec64, 'vecF': vecF,
    }


# ----------------------------------------------------------------------------
# Pure-JAX reference of the torch forward (eval), for correctness checking
# ----------------------------------------------------------------------------
def reference_forward(p, nl_mo_hidden, nl_car_hidden, crops_backbone, motion_backbone):
    hp = jax.lax.Precision.HIGHEST
    lin = lambda x, w, b: jnp.dot(x, w, precision=hp) + b

    def ln(x, g, b):
        mu = x.mean(-1, keepdims=True)
        var = ((x - mu) ** 2).mean(-1, keepdims=True)
        return (x - mu) / jnp.sqrt(var + LN_EPS) * g + b

    def bn_eval(x, g, b, m, v):
        return (x - m) / jnp.sqrt(v + BN_EPS) * g + b

    def l2n(x):
        n = jnp.sqrt(jnp.sum(x * x, axis=-1, keepdims=True))
        return x / jnp.maximum(n, NORM_EPS)

    B = crops_backbone.shape[0]
    crops = crops_backbone.reshape(B, -1)
    motion = motion_backbone.reshape(B, -1)

    lang_mo = lin(jnp.maximum(ln(nl_mo_hidden.mean(1), p['lang_mo_ln_g'], p['lang_mo_ln_b']), 0.0),
                  p['lang_mo_w'], p['lang_mo_b'])
    lang_car = lin(jnp.maximum(ln(nl_car_hidden.mean(1), p['lang_car_ln_g'], p['lang_car_ln_b']), 0.0),
                   p['lang_car_w'], p['lang_car_b'])
    vis_car = lin(crops, p['dvf_w'], p['dvf_b'])
    vis_mo = lin(motion, p['dvf_bk_w'], p['dvf_bk_b'])

    proj_type1 = lin(vis_car, p['t1_w'], p['t1_b'])
    proj_color1 = lin(vis_car, p['c1_w'], p['c1_b'])
    proj_size1 = lin(vis_car, p['s1_w'], p['s1_b'])
    proj_car = lin(vis_car, p['pcar_w'], p['pcar_b'])
    proj_motion1 = lin(vis_mo, p['m1_w'], p['m1_b'])
    proj_type2 = lin(vis_mo, p['t2_w'], p['t2_b'])
    proj_color2 = lin(vis_mo, p['c2_w'], p['c2_b'])
    proj_mo = lin(vis_mo, p['pmo_w'], p['pmo_b'])
    proj_inter = lin(vis_mo, p['inter_w'], p['inter_b'])
    s = p['local_scale']
    vis_feats_merge = [proj_type1, proj_motion1, proj_color1, proj_size1, proj_car,
                       proj_type2, proj_color2, proj_mo, proj_inter]
    weighted = [s * proj_type1, s * proj_motion1, s * proj_color1, s * proj_size1,
                proj_car, proj_type2, proj_color2, proj_mo, proj_inter]
    vis_feats_cat = jnp.concatenate(weighted, axis=-1)

    lme = jnp.concatenate([lang_car, lang_mo], axis=-1)
    lme = ln(lme, p['lfm_ln_g'], p['lfm_ln_b'])
    lme = jnp.maximum(lin(lme, p['lfm_w1'], p['lfm_b1']), 0.0)
    lang_merge_embeds = lin(lme, p['lfm_w2'], p['lfm_b2'])
    lang_merge_feats = lin(lang_merge_embeds, p['down_w'], p['down_b'])

    vme = lin(jnp.concatenate([vis_car, vis_mo], axis=-1), p['vfm_w1'], p['vfm_b1'])
    vme = jnp.maximum(bn_eval(vme, p['vfm_bn_g'], p['vfm_bn_b'], p['vfm_bn_m'], p['vfm_bn_v']), 0.0)
    visual_merge_embeds = lin(vme, p['vfm_w2'], p['vfm_b2'])

    vmf = lin(vis_feats_cat, p['vff_w1'], p['vff_b1'])
    vmf = jnp.maximum(bn_eval(vmf, p['vff_bn_g'], p['vff_bn_b'], p['vff_bn_m'], p['vff_bn_v']), 0.0)
    visual_merge_feats = lin(vmf, p['vff_w2'], p['vff_b2'])

    return {
        'pairs': [(l2n(vis_car), l2n(lang_car)),
                  (l2n(vis_mo), l2n(lang_mo)),
                  (l2n(visual_merge_feats), l2n(lang_merge_feats)),
                  (l2n(visual_merge_embeds), l2n(lang_merge_embeds))],
        'logit_scale': p['logit_scale'],
        'cls_logits': [],
        'vis_features': vis_feats_merge,
    }


# ----------------------------------------------------------------------------
if __name__ == "__main__":
    assert TOTAL_VIS_FEATS_DIM == sum(HEAD_DIMS)
    assert SCALED_LANES == TYPE_DIM + MOTION_DIM + COLOR_DIM + SIZE_DIM

    key = jax.random.PRNGKey(0)
    k1, k2, k3, k4 = jax.random.split(key, 4)
    # synthetic stand-ins for BERT last_hidden_state and backbone pooled maps
    nl_mo_hidden = jax.random.normal(k1, (BATCH, SEQ, EMBED_DIM), jnp.float32)
    nl_car_hidden = jax.random.normal(k2, (BATCH, SEQ, EMBED_DIM), jnp.float32)
    crops_backbone = jax.random.normal(k3, (BATCH, IMG_IN_DIM, 1, 1), jnp.float32)
    motion_backbone = jax.random.normal(k4, (BATCH, IMG_IN_DIM, 1, 1), jnp.float32)

    params = init_params(jax.random.PRNGKey(42))
    # Perturb runtime-learned scalar / BN running stats so the reference check
    # actually exercises local-scale weighting and folded BatchNorm (the
    # __init__ values of 1/0 would make those paths identities).
    pk = jax.random.split(jax.random.PRNGKey(7), 6)
    params['local_scale'] = jnp.asarray(0.7, jnp.float32)
    params['vfm_bn_m'] = 0.1 * jax.random.normal(pk[0], params['vfm_bn_m'].shape)
    params['vfm_bn_v'] = 1.0 + 0.5 * jax.random.uniform(pk[1], params['vfm_bn_v'].shape)
    params['vff_bn_m'] = 0.1 * jax.random.normal(pk[2], params['vff_bn_m'].shape)
    params['vff_bn_v'] = 1.0 + 0.5 * jax.random.uniform(pk[3], params['vff_bn_v'].shape)
    params['vfm_bn_g'] = 1.0 + 0.2 * jax.random.normal(pk[4], params['vfm_bn_g'].shape)
    params['vff_bn_g'] = 1.0 + 0.2 * jax.random.normal(pk[5], params['vff_bn_g'].shape)

    kparams = prepare_kernel_params(params)

    fwd = jax.jit(siamese_forward)
    out = fwd(kparams, nl_mo_hidden, nl_car_hidden, crops_backbone, motion_backbone)
    out = jax.block_until_ready(out)

    # shape / sanity checks
    assert out['pairs'][0][0].shape == (BATCH, EMBED_DIM)
    assert out['pairs'][1][1].shape == (BATCH, EMBED_DIM)
    assert out['pairs'][2][0].shape == (BATCH, TOTAL_VIS_FEATS_DIM)
    assert out['pairs'][3][0].shape == (BATCH, MERGE_DIM)
    assert len(out['vis_features']) == 9
    assert tuple(v.shape[-1] for v in out['vis_features']) == HEAD_DIMS

    # correctness vs pure-JAX reference of the torch eval forward
    ref = reference_forward(params, nl_mo_hidden, nl_car_hidden,
                            crops_backbone, motion_backbone)
    for (kv, kl), (rv, rl) in zip(out['pairs'], ref['pairs']):
        np.testing.assert_allclose(np.asarray(kv), np.asarray(rv), rtol=3e-3, atol=3e-3)
        np.testing.assert_allclose(np.asarray(kl), np.asarray(rl), rtol=3e-3, atol=3e-3)
    for kf, rf in zip(out['vis_features'], ref['vis_features']):
        np.testing.assert_allclose(np.asarray(kf), np.asarray(rf), rtol=3e-3, atol=3e-3)

    print("KERNEL_OK")
</pallas_src>

<mosaic_0001>
module attributes {stable_mosaic.version = 11 : i64} {
  func.func @_fused_forward_kernel(%arg0: memref<1xf32, #tpu.memory_space<smem>>, %arg1: memref<2x8x32xf32, #tpu.memory_space<vmem>>, %arg2: memref<2x8x32xf32, #tpu.memory_space<vmem>>, %arg3: memref<2x128xf32, #tpu.memory_space<vmem>>, %arg4: memref<448x64xf32, #tpu.memory_space<vmem>>, %arg5: memref<265x65xf32, #tpu.memory_space<vmem>>, %arg6: memref<4x32xf32, #tpu.memory_space<vmem>>, %arg7: memref<10x64xf32, #tpu.memory_space<vmem>>, %arg8: memref<6x65xf32, #tpu.memory_space<vmem>>, %arg9: memref<2x1152xf32, #tpu.memory_space<vmem>>) attributes {dimension_semantics = [], scalar_prefetch = 0 : i64, scratch_operands = 0 : i64, tpu.core_type = #tpu.core_type<tc>} {
    %c0 = arith.constant 0 : index
    %0 = memref.load %arg0[%c0] : memref<1xf32, #tpu.memory_space<smem>>
    %c0_0 = arith.constant 0 : index
    %c0_1 = arith.constant 0 : index
    %c0_2 = arith.constant 0 : index
    %1 = vector.load %arg1[%c0_0, %c0_1, %c0_2] : memref<2x8x32xf32, #tpu.memory_space<vmem>>, vector<2x8x32xf32>
    %cst = arith.constant dense<0.000000e+00> : vector<2x32xf32>
    %2 = vector.multi_reduction <add>, %1, %cst [1] : vector<2x8x32xf32> to vector<2x32xf32>
    %cst_3 = arith.constant 8.000000e+00 : f32
    %3 = vector.broadcast %cst_3 : f32 to vector<2x32xf32>
    %4 = arith.divf %2, %3 : vector<2x32xf32>
    %c0_4 = arith.constant 0 : index
    %c0_5 = arith.constant 0 : index
    %5 = vector.load %arg6[%c0_4, %c0_5] : memref<4x32xf32, #tpu.memory_space<vmem>>, vector<1x32xf32>
    %c1 = arith.constant 1 : index
    %c0_6 = arith.constant 0 : index
    %6 = vector.load %arg6[%c1, %c0_6] : memref<4x32xf32, #tpu.memory_space<vmem>>, vector<1x32xf32>
    %cst_7 = arith.constant dense<0.000000e+00> : vector<2xf32>
    %7 = vector.multi_reduction <add>, %4, %cst_7 [1] : vector<2x32xf32> to vector<2xf32>
    %8 = vector.shape_cast %7 : vector<2xf32> to vector<2x1xf32>
    %cst_8 = arith.constant 3.200000e+01 : f32
    %9 = vector.broadcast %cst_8 : f32 to vector<2x1xf32>
    %10 = arith.divf %8, %9 : vector<2x1xf32>
    %11 = vector.broadcast %10 : vector<2x1xf32> to vector<2x32xf32>
    %12 = arith.subf %4, %11 : vector<2x32xf32>
    %13 = arith.mulf %12, %12 : vector<2x32xf32>
    %cst_9 = arith.constant dense<0.000000e+00> : vector<2xf32>
    %14 = vector.multi_reduction <add>, %13, %cst_9 [1] : vector<2x32xf32> to vector<2xf32>
    %15 = vector.shape_cast %14 : vector<2xf32> to vector<2x1xf32>
    %cst_10 = arith.constant 3.200000e+01 : f32
    %16 = vector.broadcast %cst_10 : f32 to vector<2x1xf32>
    %17 = arith.divf %15, %16 : vector<2x1xf32>
    %18 = vector.broadcast %10 : vector<2x1xf32> to vector<2x32xf32>
    %19 = arith.subf %4, %18 : vector<2x32xf32>
    %cst_11 = arith.constant 9.99999974E-6 : f32
    %20 = vector.broadcast %cst_11 : f32 to vector<2x1xf32>
    %21 = arith.addf %17, %20 : vector<2x1xf32>
    %22 = math.rsqrt %21 : vector<2x1xf32>
    %23 = vector.broadcast %22 : vector<2x1xf32> to vector<2x32xf32>
    %24 = arith.mulf %19, %23 : vector<2x32xf32>
    %25 = vector.broadcast %5 : vector<1x32xf32> to vector<2x32xf32>
    %26 = arith.mulf %24, %25 : vector<2x32xf32>
    %27 = vector.broadcast %6 : vector<1x32xf32> to vector<2x32xf32>
    %28 = arith.addf %26, %27 : vector<2x32xf32>
    %cst_12 = arith.constant 0.000000e+00 : f32
    %29 = vector.broadcast %cst_12 : f32 to vector<2x32xf32>
    %30 = arith.maximumf %28, %29 : vector<2x32xf32>
    %c0_13 = arith.constant 0 : index
    %c0_14 = arith.constant 0 : index
    %c0_15 = arith.constant 0 : index
    %31 = vector.load %arg2[%c0_13, %c0_14, %c0_15] : memref<2x8x32xf32, #tpu.memory_space<vmem>>, vector<2x8x32xf32>
    %cst_16 = arith.constant dense<0.000000e+00> : vector<2x32xf32>
    %32 = vector.multi_reduction <add>, %31, %cst_16 [1] : vector<2x8x32xf32> to vector<2x32xf32>
    %cst_17 = arith.constant 8.000000e+00 : f32
    %33 = vector.broadcast %cst_17 : f32 to vector<2x32xf32>
    %34 = arith.divf %32, %33 : vector<2x32xf32>
    %c2 = arith.constant 2 : index
    %c0_18 = arith.constant 0 : index
    %35 = vector.load %arg6[%c2, %c0_18] : memref<4x32xf32, #tpu.memory_space<vmem>>, vector<1x32xf32>
    %c3 = arith.constant 3 : index
    %c0_19 = arith.constant 0 : index
    %36 = vector.load %arg6[%c3, %c0_19] : memref<4x32xf32, #tpu.memory_space<vmem>>, vector<1x32xf32>
    %cst_20 = arith.constant dense<0.000000e+00> : vector<2xf32>
    %37 = vector.multi_reduction <add>, %34, %cst_20 [1] : vector<2x32xf32> to vector<2xf32>
    %38 = vector.shape_cast %37 : vector<2xf32> to vector<2x1xf32>
    %cst_21 = arith.constant 3.200000e+01 : f32
    %39 = vector.broadcast %cst_21 : f32 to vector<2x1xf32>
    %40 = arith.divf %38, %39 : vector<2x1xf32>
    %41 = vector.broadcast %40 : vector<2x1xf32> to vector<2x32xf32>
    %42 = arith.subf %34, %41 : vector<2x32xf32>
    %43 = arith.mulf %42, %42 : vector<2x32xf32>
    %cst_22 = arith.constant dense<0.000000e+00> : vector<2xf32>
    %44 = vector.multi_reduction <add>, %43, %cst_22 [1] : vector<2x32xf32> to vector<2xf32>
    %45 = vector.shape_cast %44 : vector<2xf32> to vector<2x1xf32>
    %cst_23 = arith.constant 3.200000e+01 : f32
    %46 = vector.broadcast %cst_23 : f32 to vector<2x1xf32>
    %47 = arith.divf %45, %46 : vector<2x1xf32>
    %48 = vector.broadcast %40 : vector<2x1xf32> to vector<2x32xf32>
    %49 = arith.subf %34, %48 : vector<2x32xf32>
    %cst_24 = arith.constant 9.99999974E-6 : f32
    %50 = vector.broadcast %cst_24 : f32 to vector<2x1xf32>
    %51 = arith.addf %47, %50 : vector<2x1xf32>
    %52 = math.rsqrt %51 : vector<2x1xf32>
    %53 = vector.broadcast %52 : vector<2x1xf32> to vector<2x32xf32>
    %54 = arith.mulf %49, %53 : vector<2x32xf32>
    %55 = vector.broadcast %35 : vector<1x32xf32> to vector<2x32xf32>
    %56 = arith.mulf %54, %55 : vector<2x32xf32>
    %57 = vector.broadcast %36 : vector<1x32xf32> to vector<2x32xf32>
    %58 = arith.addf %56, %57 : vector<2x32xf32>
    %cst_25 = arith.constant 0.000000e+00 : f32
    %59 = vector.broadcast %cst_25 : f32 to vector<2x32xf32>
    %60 = arith.maximumf %58, %59 : vector<2x32xf32>
    %c128 = arith.constant 128 : index
    %c0_26 = arith.constant 0 : index
    %61 = vector.load %arg4[%c128, %c0_26] : memref<448x64xf32, #tpu.memory_space<vmem>>, vector<32x64xf32>
    %cst_27 = arith.constant dense<0.000000e+00> : vector<2x64xf32>
    %62 = tpu.matmul %30, %61, %cst_27 {dimension_numbers = #tpu.dot_dimension_numbers<[1], [0], [0], [1], [0, 0, 1, 1], [], []>} : vector<2x32xf32>, vector<32x64xf32>, vector<2x64xf32> -> vector<2x64xf32>
    %c160 = arith.constant 160 : index
    %c0_28 = arith.constant 0 : index
    %63 = vector.load %arg4[%c160, %c0_28] : memref<448x64xf32, #tpu.memory_space<vmem>>, vector<32x64xf32>
    %cst_29 = arith.constant dense<0.000000e+00> : vector<2x64xf32>
    %64 = tpu.matmul %60, %63, %cst_29 {dimension_numbers = #tpu.dot_dimension_numbers<[1], [0], [0], [1], [0, 0, 1, 1], [], []>} : vector<2x32xf32>, vector<32x64xf32>, vector<2x64xf32> -> vector<2x64xf32>
    %65 = arith.addf %62, %64 : vector<2x64xf32>
    %c1_30 = arith.constant 1 : index
    %c0_31 = arith.constant 0 : index
    %66 = vector.load %arg7[%c1_30, %c0_31] : memref<10x64xf32, #tpu.memory_space<vmem>>, vector<1x64xf32>
    %67 = vector.broadcast %66 : vector<1x64xf32> to vector<2x64xf32>
    %68 = arith.addf %65, %67 : vector<2x64xf32>
    %c0_32 = arith.constant 0 : index
    %c0_33 = arith.constant 0 : index
    %69 = vector.load %arg3[%c0_32, %c0_33] : memref<2x128xf32, #tpu.memory_space<vmem>>, vector<2x128xf32>
    %c0_34 = arith.constant 0 : index
    %c0_35 = arith.constant 0 : index
    %70 = vector.load %arg4[%c0_34, %c0_35] : memref<448x64xf32, #tpu.memory_space<vmem>>, vector<128x64xf32>
    %cst_36 = arith.constant dense<0.000000e+00> : vector<2x64xf32>
    %71 = tpu.matmul %69, %70, %cst_36 {dimension_numbers = #tpu.dot_dimension_numbers<[1], [0], [0], [1], [0, 0, 1, 1], [], []>} : vector<2x128xf32>, vector<128x64xf32>, vector<2x64xf32> -> vector<2x64xf32>
    %c0_37 = arith.constant 0 : index
    %c0_38 = arith.constant 0 : index
    %72 = vector.load %arg7[%c0_37, %c0_38] : memref<10x64xf32, #tpu.memory_space<vmem>>, vector<1x64xf32>
    %73 = vector.broadcast %72 : vector<1x64xf32> to vector<2x64xf32>
    %74 = arith.addf %71, %73 : vector<2x64xf32>
    %c0_39 = arith.constant 0 : index
    %c0_40 = arith.constant 0 : index
    %75 = vector.load %arg5[%c0_39, %c0_40] : memref<265x65xf32, #tpu.memory_space<vmem>>, vector<64x65xf32>
    %cst_41 = arith.constant dense<0.000000e+00> : vector<2x65xf32>
    %76 = tpu.matmul %74, %75, %cst_41 {dimension_numbers = #tpu.dot_dimension_numbers<[1], [0], [0], [1], [0, 0, 1, 1], [], []>} : vector<2x64xf32>, vector<64x65xf32>, vector<2x65xf32> -> vector<2x65xf32>
    %c0_42 = arith.constant 0 : index
    %c0_43 = arith.constant 0 : index
    %77 = vector.load %arg8[%c0_42, %c0_43] : memref<6x65xf32, #tpu.memory_space<vmem>>, vector<1x65xf32>
    %78 = vector.broadcast %77 : vector<1x65xf32> to vector<2x65xf32>
    %79 = arith.addf %76, %78 : vector<2x65xf32>
    %80 = tpu.iota {dimensions = array<i32: 1>} : vector<2x65xi32>
    %c20_i32 = arith.constant 20 : i32
    %81 = vector.broadcast %c20_i32 : i32 to vector<2x65xi32>
    %82 = arith.cmpi slt, %80, %81 : vector<2x65xi32>
    %83 = vector.broadcast %0 : f32 to vector<2x65xf32>
    %84 = arith.mulf %83, %79 : vector<2x65xf32>
    %85 = arith.select %82, %84, %79 : vector<2x65xi1>, vector<2x65xf32>
    %c2_44 = arith.constant 2 : index
    %c0_45 = arith.constant 0 : index
    %86 = vector.load %arg7[%c2_44, %c0_45] : memref<10x64xf32, #tpu.memory_space<vmem>>, vector<1x64xf32>
    %c3_46 = arith.constant 3 : index
    %c0_47 = arith.constant 0 : index
    %87 = vector.load %arg7[%c3_46, %c0_47] : memref<10x64xf32, #tpu.memory_space<vmem>>, vector<1x64xf32>
    %cst_48 = arith.constant dense<0.000000e+00> : vector<2xf32>
    %88 = vector.multi_reduction <add>, %68, %cst_48 [1] : vector<2x64xf32> to vector<2xf32>
    %89 = vector.shape_cast %88 : vector<2xf32> to vector<2x1xf32>
    %cst_49 = arith.constant 6.400000e+01 : f32
    %90 = vector.broadcast %cst_49 : f32 to vector<2x1xf32>
    %91 = arith.divf %89, %90 : vector<2x1xf32>
    %92 = vector.broadcast %91 : vector<2x1xf32> to vector<2x64xf32>
    %93 = arith.subf %68, %92 : vector<2x64xf32>
    %94 = arith.mulf %93, %93 : vector<2x64xf32>
    %cst_50 = arith.constant dense<0.000000e+00> : vector<2xf32>
    %95 = vector.multi_reduction <add>, %94, %cst_50 [1] : vector<2x64xf32> to vector<2xf32>
    %96 = vector.shape_cast %95 : vector<2xf32> to vector<2x1xf32>
    %cst_51 = arith.constant 6.400000e+01 : f32
    %97 = vector.broadcast %cst_51 : f32 to vector<2x1xf32>
    %98 = arith.divf %96, %97 : vector<2x1xf32>
    %99 = vector.broadcast %91 : vector<2x1xf32> to vector<2x64xf32>
    %100 = arith.subf %68, %99 : vector<2x64xf32>
    %cst_52 = arith.constant 9.99999974E-6 : f32
    %101 = vector.broadcast %cst_52 : f32 to vector<2x1xf32>
    %102 = arith.addf %98, %101 : vector<2x1xf32>
    %103 = math.rsqrt %102 : vector<2x1xf32>
    %104 = vector.broadcast %103 : vector<2x1xf32> to vector<2x64xf32>
    %105 = arith.mulf %100, %104 : vector<2x64xf32>
    %106 = vector.broadcast %86 : vector<1x64xf32> to vector<2x64xf32>
    %107 = arith.mulf %105, %106 : vector<2x64xf32>
    %108 = vector.broadcast %87 : vector<1x64xf32> to vector<2x64xf32>
    %109 = arith.addf %107, %108 : vector<2x64xf32>
    %c192 = arith.constant 192 : index
    %c0_53 = arith.constant 0 : index
    %110 = vector.load %arg4[%c192, %c0_53] : memref<448x64xf32, #tpu.memory_space<vmem>>, vector<64x64xf32>
    %cst_54 = arith.constant dense<0.000000e+00> : vector<2x64xf32>
    %111 = tpu.matmul %109, %110, %cst_54 {dimension_numbers = #tpu.dot_dimension_numbers<[1], [0], [0], [1], [0, 0, 1, 1], [], []>} : vector<2x64xf32>, vector<64x64xf32>, vector<2x64xf32> -> vector<2x64xf32>
    %c4 = arith.constant 4 : index
    %c0_55 = arith.constant 0 : index
    %112 = vector.load %arg7[%c4, %c0_55] : memref<10x64xf32, #tpu.memory_space<vmem>>, vector<1x64xf32>
    %113 = vector.broadcast %112 : vector<1x64xf32> to vector<2x64xf32>
    %114 = arith.addf %111, %113 : vector<2x64xf32>
    %cst_56 = arith.constant 0.000000e+00 : f32
    %115 = vector.broadcast %cst_56 : f32 to vector<2x64xf32>
    %116 = arith.maximumf %114, %115 : vector<2x64xf32>
    %c256 = arith.constant 256 : index
    %c0_57 = arith.constant 0 : index
    %117 = vector.load %arg4[%c256, %c0_57] : memref<448x64xf32, #tpu.memory_space<vmem>>, vector<64x64xf32>
    %cst_58 = arith.constant dense<0.000000e+00> : vector<2x64xf32>
    %118 = tpu.matmul %116, %117, %cst_58 {dimension_numbers = #tpu.dot_dimension_numbers<[1], [0], [0], [1], [0, 0, 1, 1], [], []>} : vector<2x64xf32>, vector<64x64xf32>, vector<2x64xf32> -> vector<2x64xf32>
    %c5 = arith.constant 5 : index
    %c0_59 = arith.constant 0 : index
    %119 = vector.load %arg7[%c5, %c0_59] : memref<10x64xf32, #tpu.memory_space<vmem>>, vector<1x64xf32>
    %120 = vector.broadcast %119 : vector<1x64xf32> to vector<2x64xf32>
    %121 = arith.addf %118, %120 : vector<2x64xf32>
    %c64 = arith.constant 64 : index
    %c0_60 = arith.constant 0 : index
    %122 = vector.load %arg5[%c64, %c0_60] : memref<265x65xf32, #tpu.memory_space<vmem>>, vector<64x65xf32>
    %cst_61 = arith.constant dense<0.000000e+00> : vector<2x65xf32>
    %123 = tpu.matmul %121, %122, %cst_61 {dimension_numbers = #tpu.dot_dimension_numbers<[1], [0], [0], [1], [0, 0, 1, 1], [], []>} : vector<2x64xf32>, vector<64x65xf32>, vector<2x65xf32> -> vector<2x65xf32>
    %c1_62 = arith.constant 1 : index
    %c0_63 = arith.constant 0 : index
    %124 = vector.load %arg8[%c1_62, %c0_63] : memref<6x65xf32, #tpu.memory_space<vmem>>, vector<1x65xf32>
    %125 = vector.broadcast %124 : vector<1x65xf32> to vector<2x65xf32>
    %126 = arith.addf %123, %125 : vector<2x65xf32>
    %c320 = arith.constant 320 : index
    %c0_64 = arith.constant 0 : index
    %127 = vector.load %arg4[%c320, %c0_64] : memref<448x64xf32, #tpu.memory_space<vmem>>, vector<64x64xf32>
    %cst_65 = arith.constant dense<0.000000e+00> : vector<2x64xf32>
    %128 = tpu.matmul %74, %127, %cst_65 {dimension_numbers = #tpu.dot_dimension_numbers<[1], [0], [0], [1], [0, 0, 1, 1], [], []>} : vector<2x64xf32>, vector<64x64xf32>, vector<2x64xf32> -> vector<2x64xf32>
    %c6 = arith.constant 6 : index
    %c0_66 = arith.constant 0 : index
    %129 = vector.load %arg7[%c6, %c0_66] : memref<10x64xf32, #tpu.memory_space<vmem>>, vector<1x64xf32>
    %130 = vector.broadcast %129 : vector<1x64xf32> to vector<2x64xf32>
    %131 = arith.addf %128, %130 : vector<2x64xf32>
    %c7 = arith.constant 7 : index
    %c0_67 = arith.constant 0 : index
    %132 = vector.load %arg7[%c7, %c0_67] : memref<10x64xf32, #tpu.memory_space<vmem>>, vector<1x64xf32>
    %133 = vector.broadcast %132 : vector<1x64xf32> to vector<2x64xf32>
    %134 = arith.mulf %131, %133 : vector<2x64xf32>
    %c8 = arith.constant 8 : index
    %c0_68 = arith.constant 0 : index
    %135 = vector.load %arg7[%c8, %c0_68] : memref<10x64xf32, #tpu.memory_space<vmem>>, vector<1x64xf32>
    %136 = vector.broadcast %135 : vector<1x64xf32> to vector<2x64xf32>
    %137 = arith.addf %134, %136 : vector<2x64xf32>
    %cst_69 = arith.constant 0.000000e+00 : f32
    %138 = vector.broadcast %cst_69 : f32 to vector<2x64xf32>
    %139 = arith.maximumf %137, %138 : vector<2x64xf32>
    %c384 = arith.constant 384 : index
    %c0_70 = arith.constant 0 : index
    %140 = vector.load %arg4[%c384, %c0_70] : memref<448x64xf32, #tpu.memory_space<vmem>>, vector<64x64xf32>
    %cst_71 = arith.constant dense<0.000000e+00> : vector<2x64xf32>
    %141 = tpu.matmul %139, %140, %cst_71 {dimension_numbers = #tpu.dot_dimension_numbers<[1], [0], [0], [1], [0, 0, 1, 1], [], []>} : vector<2x64xf32>, vector<64x64xf32>, vector<2x64xf32> -> vector<2x64xf32>
    %c9 = arith.constant 9 : index
    %c0_72 = arith.constant 0 : index
    %142 = vector.load %arg7[%c9, %c0_72] : memref<10x64xf32, #tpu.memory_space<vmem>>, vector<1x64xf32>
    %143 = vector.broadcast %142 : vector<1x64xf32> to vector<2x64xf32>
    %144 = arith.addf %141, %143 : vector<2x64xf32>
    %c128_73 = arith.constant 128 : index
    %c0_74 = arith.constant 0 : index
    %145 = vector.load %arg5[%c128_73, %c0_74] : memref<265x65xf32, #tpu.memory_space<vmem>>, vector<65x65xf32>
    %cst_75 = arith.constant dense<0.000000e+00> : vector<2x65xf32>
    %146 = tpu.matmul %85, %145, %cst_75 {dimension_numbers = #tpu.dot_dimension_numbers<[1], [0], [0], [1], [0, 0, 1, 1], [], []>} : vector<2x65xf32>, vector<65x65xf32>, vector<2x65xf32> -> vector<2x65xf32>
    %c2_76 = arith.constant 2 : index
    %c0_77 = arith.constant 0 : index
    %147 = vector.load %arg8[%c2_76, %c0_77] : memref<6x65xf32, #tpu.memory_space<vmem>>, vector<1x65xf32>
    %148 = vector.broadcast %147 : vector<1x65xf32> to vector<2x65xf32>
    %149 = arith.addf %146, %148 : vector<2x65xf32>
    %c3_78 = arith.constant 3 : index
    %c0_79 = arith.constant 0 : index
    %150 = vector.load %arg8[%c3_78, %c0_79] : memref<6x65xf32, #tpu.memory_space<vmem>>, vector<1x65xf32>
    %151 = vector.broadcast %150 : vector<1x65xf32> to vector<2x65xf32>
    %152 = arith.mulf %149, %151 : vector<2x65xf32>
    %c4_80 = arith.constant 4 : index
    %c0_81 = arith.constant 0 : index
    %153 = vector.load %arg8[%c4_80, %c0_81] : memref<6x65xf32, #tpu.memory_space<vmem>>, vector<1x65xf32>
    %154 = vector.broadcast %153 : vector<1x65xf32> to vector<2x65xf32>
    %155 = arith.addf %152, %154 : vector<2x65xf32>
    %cst_82 = arith.constant 0.000000e+00 : f32
    %156 = vector.broadcast %cst_82 : f32 to vector<2x65xf32>
    %157 = arith.maximumf %155, %156 : vector<2x65xf32>
    %c200 = arith.constant 200 : index
    %c0_83 = arith.constant 0 : index
    %158 = vector.load %arg5[%c200, %c0_83] : memref<265x65xf32, #tpu.memory_space<vmem>>, vector<65x65xf32>
    %cst_84 = arith.constant dense<0.000000e+00> : vector<2x65xf32>
    %159 = tpu.matmul %157, %158, %cst_84 {dimension_numbers = #tpu.dot_dimension_numbers<[1], [0], [0], [1], [0, 0, 1, 1], [], []>} : vector<2x65xf32>, vector<65x65xf32>, vector<2x65xf32> -> vector<2x65xf32>
    %c5_85 = arith.constant 5 : index
    %c0_86 = arith.constant 0 : index
    %160 = vector.load %arg8[%c5_85, %c0_86] : memref<6x65xf32, #tpu.memory_space<vmem>>, vector<1x65xf32>
    %161 = vector.broadcast %160 : vector<1x65xf32> to vector<2x65xf32>
    %162 = arith.addf %159, %161 : vector<2x65xf32>
    %cst_87 = arith.constant 0.000000e+00 : f32
    %163 = vector.broadcast %cst_87 : f32 to vector<2x1152xf32>
    %c0_88 = arith.constant 0 : index
    %c0_89 = arith.constant 0 : index
    %164 = vector.load %arg9[%c0_88, %c0_89] : memref<2x1152xf32, #tpu.memory_space<vmem>>, vector<2x1152xf32>
    tpu.vector_store %arg9[%c0_88, %c0_89], %163 {strides = array<i32>} : memref<2x1152xf32, #tpu.memory_space<vmem>>, vector<2x1152xf32>,
    %165 = vector.extract_strided_slice %74 {offsets = [0, 0], sizes = [2, 32], strides = [1, 1]} : vector<2x64xf32> to vector<2x32xf32>
    %166 = arith.mulf %165, %165 : vector<2x32xf32>
    %cst_90 = arith.constant dense<0.000000e+00> : vector<2xf32>
    %167 = vector.multi_reduction <add>, %166, %cst_90 [1] : vector<2x32xf32> to vector<2xf32>
    %168 = vector.shape_cast %167 : vector<2xf32> to vector<2x1xf32>
    %169 = math.sqrt %168 : vector<2x1xf32>
    %cst_91 = arith.constant 9.99999996E-13 : f32
    %170 = vector.broadcast %cst_91 : f32 to vector<2x1xf32>
    %171 = arith.maximumf %169, %170 : vector<2x1xf32>
    %172 = vector.broadcast %171 : vector<2x1xf32> to vector<2x32xf32>
    %173 = arith.divf %165, %172 : vector<2x32xf32>
    %c0_92 = arith.constant 0 : index
    %c0_93 = arith.constant 0 : index
    %174 = vector.load %arg9[%c0_92, %c0_93] : memref<2x1152xf32, #tpu.memory_space<vmem>>, vector<2x32xf32>
    tpu.vector_store %arg9[%c0_92, %c0_93], %173 {strides = array<i32>} : memref<2x1152xf32, #tpu.memory_space<vmem>>, vector<2x32xf32>,
    %175 = vector.extract_strided_slice %68 {offsets = [0, 0], sizes = [2, 32], strides = [1, 1]} : vector<2x64xf32> to vector<2x32xf32>
    %176 = arith.mulf %175, %175 : vector<2x32xf32>
    %cst_94 = arith.constant dense<0.000000e+00> : vector<2xf32>
    %177 = vector.multi_reduction <add>, %176, %cst_94 [1] : vector<2x32xf32> to vector<2xf32>
    %178 = vector.shape_cast %177 : vector<2xf32> to vector<2x1xf32>
    %179 = math.sqrt %178 : vector<2x1xf32>
    %cst_95 = arith.constant 9.99999996E-13 : f32
    %180 = vector.broadcast %cst_95 : f32 to vector<2x1xf32>
    %181 = arith.maximumf %179, %180 : vector<2x1xf32>
    %182 = vector.broadcast %181 : vector<2x1xf32> to vector<2x32xf32>
    %183 = arith.divf %175, %182 : vector<2x32xf32>
    %c0_96 = arith.constant 0 : index
    %c128_97 = arith.constant 128 : index
    %184 = vector.load %arg9[%c0_96, %c128_97] : memref<2x1152xf32, #tpu.memory_space<vmem>>, vector<2x32xf32>
    tpu.vector_store %arg9[%c0_96, %c128_97], %183 {strides = array<i32>} : memref<2x1152xf32, #tpu.memory_space<vmem>>, vector<2x32xf32>,
    %185 = vector.extract_strided_slice %74 {offsets = [0, 32], sizes = [2, 32], strides = [1, 1]} : vector<2x64xf32> to vector<2x32xf32>
    %186 = arith.mulf %185, %185 : vector<2x32xf32>
    %cst_98 = arith.constant dense<0.000000e+00> : vector<2xf32>
    %187 = vector.multi_reduction <add>, %186, %cst_98 [1] : vector<2x32xf32> to vector<2xf32>
    %188 = vector.shape_cast %187 : vector<2xf32> to vector<2x1xf32>
    %189 = math.sqrt %188 : vector<2x1xf32>
    %cst_99 = arith.constant 9.99999996E-13 : f32
    %190 = vector.broadcast %cst_99 : f32 to vector<2x1xf32>
    %191 = arith.maximumf %189, %190 : vector<2x1xf32>
    %192 = vector.broadcast %191 : vector<2x1xf32> to vector<2x32xf32>
    %193 = arith.divf %185, %192 : vector<2x32xf32>
    %c0_100 = arith.constant 0 : index
    %c256_101 = arith.constant 256 : index
    %194 = vector.load %arg9[%c0_100, %c256_101] : memref<2x1152xf32, #tpu.memory_space<vmem>>, vector<2x32xf32>
    tpu.vector_store %arg9[%c0_100, %c256_101], %193 {strides = array<i32>} : memref<2x1152xf32, #tpu.memory_space<vmem>>, vector<2x32xf32>,
    %195 = vector.extract_strided_slice %68 {offsets = [0, 32], sizes = [2, 32], strides = [1, 1]} : vector<2x64xf32> to vector<2x32xf32>
    %196 = arith.mulf %195, %195 : vector<2x32xf32>
    %cst_102 = arith.constant dense<0.000000e+00> : vector<2xf32>
    %197 = vector.multi_reduction <add>, %196, %cst_102 [1] : vector<2x32xf32> to vector<2xf32>
    %198 = vector.shape_cast %197 : vector<2xf32> to vector<2x1xf32>
    %199 = math.sqrt %198 : vector<2x1xf32>
    %cst_103 = arith.constant 9.99999996E-13 : f32
    %200 = vector.broadcast %cst_103 : f32 to vector<2x1xf32>
    %201 = arith.maximumf %199, %200 : vector<2x1xf32>
    %202 = vector.broadcast %201 : vector<2x1xf32> to vector<2x32xf32>
    %203 = arith.divf %195, %202 : vector<2x32xf32>
    %c0_104 = arith.constant 0 : index
    %c384_105 = arith.constant 384 : index
    %204 = vector.load %arg9[%c0_104, %c384_105] : memref<2x1152xf32, #tpu.memory_space<vmem>>, vector<2x32xf32>
    tpu.vector_store %arg9[%c0_104, %c384_105], %203 {strides = array<i32>} : memref<2x1152xf32, #tpu.memory_space<vmem>>, vector<2x32xf32>,
    %205 = arith.mulf %162, %162 : vector<2x65xf32>
    %cst_106 = arith.constant dense<0.000000e+00> : vector<2xf32>
    %206 = vector.multi_reduction <add>, %205, %cst_106 [1] : vector<2x65xf32> to vector<2xf32>
    %207 = vector.shape_cast %206 : vector<2xf32> to vector<2x1xf32>
    %208 = math.sqrt %207 : vector<2x1xf32>
    %cst_107 = arith.constant 9.99999996E-13 : f32
    %209 = vector.broadcast %cst_107 : f32 to vector<2x1xf32>
    %210 = arith.maximumf %208, %209 : vector<2x1xf32>
    %211 = vector.broadcast %210 : vector<2x1xf32> to vector<2x65xf32>
    %212 = arith.divf %162, %211 : vector<2x65xf32>
    %c0_108 = arith.constant 0 : index
    %c512 = arith.constant 512 : index
    %213 = vector.load %arg9[%c0_108, %c512] : memref<2x1152xf32, #tpu.memory_space<vmem>>, vector<2x65xf32>
    tpu.vector_store %arg9[%c0_108, %c512], %212 {strides = array<i32>} : memref<2x1152xf32, #tpu.memory_space<vmem>>, vector<2x65xf32>,
    %214 = arith.mulf %126, %126 : vector<2x65xf32>
    %cst_109 = arith.constant dense<0.000000e+00> : vector<2xf32>
    %215 = vector.multi_reduction <add>, %214, %cst_109 [1] : vector<2x65xf32> to vector<2xf32>
    %216 = vector.shape_cast %215 : vector<2xf32> to vector<2x1xf32>
    %217 = math.sqrt %216 : vector<2x1xf32>
    %cst_110 = arith.constant 9.99999996E-13 : f32
    %218 = vector.broadcast %cst_110 : f32 to vector<2x1xf32>
    %219 = arith.maximumf %217, %218 : vector<2x1xf32>
    %220 = vector.broadcast %219 : vector<2x1xf32> to vector<2x65xf32>
    %221 = arith.divf %126, %220 : vector<2x65xf32>
    %c0_111 = arith.constant 0 : index
    %c640 = arith.constant 640 : index
    %222 = vector.load %arg9[%c0_111, %c640] : memref<2x1152xf32, #tpu.memory_space<vmem>>, vector<2x65xf32>
    tpu.vector_store %arg9[%c0_111, %c640], %221 {strides = array<i32>} : memref<2x1152xf32, #tpu.memory_space<vmem>>, vector<2x65xf32>,
    %223 = arith.mulf %144, %144 : vector<2x64xf32>
    %cst_112 = arith.constant dense<0.000000e+00> : vector<2xf32>
    %224 = vector.multi_reduction <add>, %223, %cst_112 [1] : vector<2x64xf32> to vector<2xf32>
    %225 = vector.shape_cast %224 : vector<2xf32> to vector<2x1xf32>
    %226 = math.sqrt %225 : vector<2x1xf32>
    %cst_113 = arith.constant 9.99999996E-13 : f32
    %227 = vector.broadcast %cst_113 : f32 to vector<2x1xf32>
    %228 = arith.maximumf %226, %227 : vector<2x1xf32>
    %229 = vector.broadcast %228 : vector<2x1xf32> to vector<2x64xf32>
    %230 = arith.divf %144, %229 : vector<2x64xf32>
    %c0_114 = arith.constant 0 : index
    %c768 = arith.constant 768 : index
    %231 = vector.load %arg9[%c0_114, %c768] : memref<2x1152xf32, #tpu.memory_space<vmem>>, vector<2x64xf32>
    tpu.vector_store %arg9[%c0_114, %c768], %230 {strides = array<i32>} : memref<2x1152xf32, #tpu.memory_space<vmem>>, vector<2x64xf32>,
    %232 = arith.mulf %121, %121 : vector<2x64xf32>
    %cst_115 = arith.constant dense<0.000000e+00> : vector<2xf32>
    %233 = vector.multi_reduction <add>, %232, %cst_115 [1] : vector<2x64xf32> to vector<2xf32>
    %234 = vector.shape_cast %233 : vector<2xf32> to vector<2x1xf32>
    %235 = math.sqrt %234 : vector<2x1xf32>
    %cst_116 = arith.constant 9.99999996E-13 : f32
    %236 = vector.broadcast %cst_116 : f32 to vector<2x1xf32>
    %237 = arith.maximumf %235, %236 : vector<2x1xf32>
    %238 = vector.broadcast %237 : vector<2x1xf32> to vector<2x64xf32>
    %239 = arith.divf %121, %238 : vector<2x64xf32>
    %c0_117 = arith.constant 0 : index
    %c896 = arith.constant 896 : index
    %240 = vector.load %arg9[%c0_117, %c896] : memref<2x1152xf32, #tpu.memory_space<vmem>>, vector<2x64xf32>
    tpu.vector_store %arg9[%c0_117, %c896], %239 {strides = array<i32>} : memref<2x1152xf32, #tpu.memory_space<vmem>>, vector<2x64xf32>,
    %c0_118 = arith.constant 0 : index
    %c1024 = arith.constant 1024 : index
    %241 = vector.load %arg9[%c0_118, %c1024] : memref<2x1152xf32, #tpu.memory_space<vmem>>, vector<2x65xf32>
    tpu.vector_store %arg9[%c0_118, %c1024], %79 {strides = array<i32>} : memref<2x1152xf32, #tpu.memory_space<vmem>>, vector<2x65xf32>,
    return
  }
}

</mosaic_0001>

<llo_original>
// kernel: siamese_forward.1
$region0: #{siamese_forward.1}
  #allocation0 [shape = 'u32[]', space=smem, size = 0x4, offset = 0x4, fixed_abs, tag = 'smem constant byte address 0x4 - core index']
  #allocation1 [shape = 'u32[144,128]{1,0:T(1,128)}', space=vmem, size = 0x12000, scoped, tag = 'internal scratch']
  #allocation2 [shape = 'f32[1]{0:T(128)S(6)}', space=smem, size = 0x200, scoped, tag = 'scoped memory for siamese_forward.1']
  %s0 = inlined_call_operand.<no memory space> [shape: f32[1], index: 0, kind: input, shape index: {}]
  %s1 = inlined_call_operand.vmem [shape: f32[2,8,32], index: 1, kind: input, shape index: {}]
  %s2 = inlined_call_operand.vmem [shape: f32[2,8,32], index: 2, kind: input, shape index: {}]
  %s3 = inlined_call_operand.vmem [shape: f32[2,128], index: 3, kind: input, shape index: {}]
  %s4 = inlined_call_operand.vmem [shape: f32[448,64], index: 4, kind: input, shape index: {}]
  %s5 = inlined_call_operand.vmem [shape: f32[265,65], index: 5, kind: input, shape index: {}]
  %s6 = inlined_call_operand.vmem [shape: f32[4,32], index: 6, kind: input, shape index: {}]
  %s7 = inlined_call_operand.vmem [shape: f32[10,64], index: 7, kind: input, shape index: {}]
  %s8 = inlined_call_operand.vmem [shape: f32[6,65], index: 8, kind: input, shape index: {}]
  %s9 = inlined_call_operand.vmem [shape: f32[2,1152], index: 9, kind: output, shape index: {}]
  %s10 = sld [smem:[#allocation0]]
  $region46: #{siamese_forward.1} parent=0
    _
  %s12 = ssub.s32 1, %s10
  %s13 = scalar_select 0, %s12, %s10
  %14 = sst [smem:[#allocation2]] %s0
  // Predicated region
  $region2: #{siamese_forward.1} parent=0 // pred_check
    _
  $region3: #{siamese_forward.1} parent=0 // pred_check_branch
    %16 = sbr.rel (0) target = $region5
  $region4: #{siamese_forward.1} parent=0 // pred_region
    _
  $region5: #{siamese_forward.1} parent=0 // pred_fallthru
    _
  // Predicated region
  $region6: #{siamese_forward.1} parent=0 // pred_check
    _
  $region7: #{siamese_forward.1} parent=0 // pred_check_branch
    %18 = sbr.rel (0) target = $region9
  $region8: #{siamese_forward.1} parent=0 // pred_region
    _
  $region9: #{siamese_forward.1} parent=0 // pred_fallthru
    _
  // Predicated region
  $region10: #{siamese_forward.1} parent=0 // pred_check
    _
  $region11: #{siamese_forward.1} parent=0 // pred_check_branch
    %20 = sbr.rel (0) target = $region13
  $region12: #{siamese_forward.1} parent=0 // pred_region
    _
  $region13: #{siamese_forward.1} parent=0 // pred_fallthru
    _
  // Predicated region
  $region14: #{siamese_forward.1} parent=0 // pred_check
    _
  $region15: #{siamese_forward.1} parent=0 // pred_check_branch
    %22 = sbr.rel (0) target = $region17
  $region16: #{siamese_forward.1} parent=0 // pred_region
    _
  $region17: #{siamese_forward.1} parent=0 // pred_fallthru
    _
  // Predicated region
  $region18: #{siamese_forward.1} parent=0 // pred_check
    _
  $region19: #{siamese_forward.1} parent=0 // pred_check_branch
    %24 = sbr.rel (0) target = $region21
  $region20: #{siamese_forward.1} parent=0 // pred_region
    _
  $region21: #{siamese_forward.1} parent=0 // pred_fallthru
    _
  // Predicated region
  $region22: #{siamese_forward.1} parent=0 // pred_check
    _
  $region23: #{siamese_forward.1} parent=0 // pred_check_branch
    %26 = sbr.rel (0) target = $region25
  $region24: #{siamese_forward.1} parent=0 // pred_region
    _
  $region25: #{siamese_forward.1} parent=0 // pred_fallthru
    _
  // Predicated region
  $region26: #{siamese_forward.1} parent=0 // pred_check
    _
  $region27: #{siamese_forward.1} parent=0 // pred_check_branch
    %28 = sbr.rel (0) target = $region29
  $region28: #{siamese_forward.1} parent=0 // pred_region
    _
  $region29: #{siamese_forward.1} parent=0 // pred_fallthru
    _
  // Predicated region
  $region30: #{siamese_forward.1} parent=0 // pred_check
    _
  $region31: #{siamese_forward.1} parent=0 // pred_check_branch
    %30 = sbr.rel (0) target = $region33
  $region32: #{siamese_forward.1} parent=0 // pred_region
    _
  $region33: #{siamese_forward.1} parent=0 // pred_fallthru
    _
  // Predicated region
  $region34: #{siamese_forward.1} parent=0 // pred_check
    _
  $region35: #{siamese_forward.1} parent=0 // pred_check_branch
    %32 = sbr.rel (0) target = $region37
  $region36: #{siamese_forward.1} parent=0 // pred_region
    _
  $region37: #{siamese_forward.1} parent=0 // pred_fallthru
    _
  %s33 = sld [smem:[#allocation2]]
  %v34 = vld [vmem:[%s1] sm:$0xff]
  %v35 = vld [vmem:[%s1 + $0x8] sm:$0xff]
  %vm36 = vcmask 261120
  %v37 = vsel %vm36, %v34, 0.0
  %v38 = vrot.slane %v37, 4
  %v39 = vadd.f32 %v37, %v38
  %v40 = vrot.slane %v39, 2
  %v41 = vadd.f32 %v39, %v40
  %v42 = vrot.slane %v41, 1
  %v43 = vadd.f32 %v41, %v42
  %v44 = vsel %vm36, %v35, 0.0
  %v45 = vrot.slane %v44, 4
  %v46 = vadd.f32 %v44, %v45
  %v47 = vrot.slane %v46, 2
  %v48 = vadd.f32 %v46, %v47
  %v49 = vrot.slane %v48, 1
  %v50 = vadd.f32 %v48, %v49
  %v51 = vrcp.pop 8.0
  %v52 = vmul.f32 %v43, %v51
  %v53 = vmul.f32 %v50, %v51
  %v54 = vld [vmem:[%s6] sm:$0x1]
  %v55 = vld [vmem:[%s6 + $0x1] sm:$0x1]
  %vm58 = vcmask 1041409
  %v59 = vsel %vm58, %v53, %v52
  %vm61 = vcmask 254976
  %v62 = vsel %vm61, %v59, 0.0
  %63 = vadd.xlane.f32.xlu0 %v62
  %v64 = vpop.xlane.xlu0 %63
  %v65 = vrcp.pop 32.0
  %v66 = vmul.f32 %v64, %v65
  %v68 = vrot.slane %v66, 1
  %v71 = vsub.f32 %v52, %v66
  %v72 = vsub.f32 %v53, %v68
  %v73 = vmul.f32 %v71, %v71
  %v74 = vmul.f32 %v72, %v72
  %v77 = vrot.slane %v74, 7
  %v78 = vsel %vm58, %v77, %v73
  %v80 = vsel %vm61, %v78, 0.0
  %81 = vadd.xlane.f32.xlu0 %v80
  %v82 = vpop.xlane.xlu0 %81
  %v83 = vmul.f32 %v82, %v65
  %v84 = vadd.f32 %v83, 1e-05
  %v85 = vrsqrt.pop %v84
  %v87 = vrot.slane %v85, 1
  %v90 = vmul.f32 %v71, %v85
  %v91 = vmul.f32 %v72, %v87
  %v92 = vlaneseq
  %v93 = vshrl.u32 %v92, 7
  %v94 = vsub.s32 0, %v93
  %v95 = vrot.slane %v54, %v94
  %v96 = vmul.f32 %v90, %v95
  %v97 = vmul.f32 %v91, %v95
  %v98 = vlaneseq
  %v99 = vshrl.u32 %v98, 7
  %v100 = vsub.s32 0, %v99
  %v101 = vrot.slane %v55, %v100
  %v102 = vadd.f32 %v96, %v101
  %v103 = vadd.f32 %v97, %v101
  %v104 = vmax.f32 %v102, 0.0
  %v105 = vmax.f32 %v103, 0.0
  %v106 = vld [vmem:[%s2] sm:$0xff]
  %v107 = vld [vmem:[%s2 + $0x8] sm:$0xff]
  %v108 = vsel %vm36, %v106, 0.0
  %v109 = vrot.slane %v108, 4
  %v110 = vadd.f32 %v108, %v109
  %v111 = vrot.slane %v110, 2
  %v112 = vadd.f32 %v110, %v111
  %v113 = vrot.slane %v112, 1
  %v114 = vadd.f32 %v112, %v113
  %v115 = vsel %vm36, %v107, 0.0
  %v116 = vrot.slane %v115, 4
  %v117 = vadd.f32 %v115, %v116
  %v118 = vrot.slane %v117, 2
  %v119 = vadd.f32 %v117, %v118
  %v120 = vrot.slane %v119, 1
  %v121 = vadd.f32 %v119, %v120
  %v122 = vmul.f32 %v114, %v51
  %v123 = vmul.f32 %v121, %v51
  %v124 = vld [vmem:[%s6 + $0x2] sm:$0x1]
  %v125 = vld [vmem:[%s6 + $0x3] sm:$0x1]
  %v128 = vsel %vm58, %v123, %v122
  %v130 = vsel %vm61, %v128, 0.0
  %131 = vadd.xlane.f32.xlu0 %v130
  %v132 = vpop.xlane.xlu0 %131
  %v133 = vmul.f32 %v132, %v65
  %v135 = vrot.slane %v133, 1
  %v138 = vsub.f32 %v122, %v133
  %v139 = vsub.f32 %v123, %v135
  %v140 = vmul.f32 %v138, %v138
  %v141 = vmul.f32 %v139, %v139
  %v144 = vrot.slane %v141, 7
  %v145 = vsel %vm58, %v144, %v140
  %v147 = vsel %vm61, %v145, 0.0
  %148 = vadd.xlane.f32.xlu0 %v147
  %v149 = vpop.xlane.xlu0 %148
  %v150 = vmul.f32 %v149, %v65
  %v151 = vadd.f32 %v150, 1e-05
  %v152 = vrsqrt.pop %v151
  %v154 = vrot.slane %v152, 1
  %v157 = vmul.f32 %v138, %v152
  %v158 = vmul.f32 %v139, %v154
  %v159 = vlaneseq
  %v160 = vshrl.u32 %v159, 7
  %v161 = vsub.s32 0, %v160
  %v162 = vrot.slane %v124, %v161
  %v163 = vmul.f32 %v157, %v162
  %v164 = vmul.f32 %v158, %v162
  %v165 = vlaneseq
  %v166 = vshrl.u32 %v165, 7
  %v167 = vsub.s32 0, %v166
  %v168 = vrot.slane %v125, %v167
  %v169 = vadd.f32 %v163, %v168
  %v170 = vadd.f32 %v164, %v168
  %v171 = vmax.f32 %v169, 0.0
  %v172 = vmax.f32 %v170, 0.0
  %v173 = vld [vmem:[%s4 + $0x80] sm:$0xff]
  %v174 = vld [vmem:[%s4 + $0x88] sm:$0xff]
  %v175 = vld [vmem:[%s4 + $0x90] sm:$0xff]
  %v176 = vld [vmem:[%s4 + $0x98] sm:$0xff]
  %v177 = vld [vmem:[%s4 + $0xa0] sm:$0xff]
  %v178 = vld [vmem:[%s4 + $0xa8] sm:$0xff]
  %v179 = vld [vmem:[%s4 + $0xb0] sm:$0xff]
  %v180 = vld [vmem:[%s4 + $0xb8] sm:$0xff]
  %v183 = vrot.slane %v172, 7
  %v184 = vsel %vm58, %v183, %v171
  %v185 = vsel %vm36, %v184, 0
  %187 = vmatprep.subr.mxu0 0.0
  %188 = vmatpush1.msra.mxu0 %v177
  %189 = vmatprep.subr.mxu0 0.0
  %190 = vmatpush1.msra.mxu0 %v178
  %191 = vmatprep.subr.mxu0 0.0
  %192 = vmatpush1.msra.mxu0 %v179
  %193 = vmatprep.subr.mxu0 0.0
  %194 = vmatpush1.msra.mxu0 %v180
  %195 = vmatprep.subr.mxu0 0.0
  %196 = vmatpush1.msra.mxu0 0.0
  %197 = vmatprep.subr.mxu0 0.0
  %198 = vmatpush1.msra.mxu0 0.0
  %199 = vmatprep.subr.mxu0 0.0
  %200 = vmatpush1.msra.mxu0 0.0
  %201 = vmatprep.subr.mxu0 0.0
  %202 = vmatpush1.msra.mxu0 0.0
  %203 = vmatprep.subr.mxu0 0.0
  %204 = vmatpush1.msra.mxu0 0.0
  %205 = vmatprep.subr.mxu0 0.0
  %206 = vmatpush1.msra.mxu0 0.0
  %207 = vmatprep.subr.mxu0 0.0
  %208 = vmatpush1.msra.mxu0 0.0
  %209 = vmatprep.subr.mxu0 0.0
  %210 = vmatpush1.msra.mxu0 0.0
  %211 = vmatprep.subr.mxu0 0.0
  %212 = vmatpush1.msra.mxu0 0.0
  %213 = vmatprep.subr.mxu0 0.0
  %214 = vmatpush1.msra.mxu0 0.0
  %215 = vmatprep.subr.mxu0 0.0
  %216 = vmatpush1.msra.mxu0 0.0
  %217 = vmatprep.subr.mxu0 0.0
  %218 = vmatpush1.msra.mxu0 0.0
  %219 = vmatprep.subr.mxu0 0.0
  %220 = vmatpush1.msra.mxu0 0.0
  %221 = vmatprep.subr.mxu0 0.0
  %222 = vmatpush1.msra.mxu0 0.0
  %223 = vmatprep.subr.mxu0 0.0
  %224 = vmatpush1.msra.mxu0 0.0
  %225 = vmatprep.subr.mxu0 0.0
  %226 = vmatpush1.msra.mxu0 0.0
  %227 = vmatprep.subr.mxu0 0.0
  %228 = vmatpush1.msra.mxu0 0.0
  %229 = vmatprep.subr.mxu0 0.0
  %230 = vmatpush1.msra.mxu0 0.0
  %231 = vmatprep.subr.mxu0 0.0
  %232 = vmatpush1.msra.mxu0 0.0
  %233 = vmatprep.subr.mxu0 0.0
  %234 = vmatpush1.msra.mxu0 0.0
  %235 = vmatprep.subr.mxu0 0.0
  %236 = vmatpush1.msra.mxu0 0.0
  %237 = vmatprep.subr.mxu0 0.0
  %238 = vmatpush1.msra.mxu0 0.0
  %239 = vmatprep.subr.mxu0 0.0
  %240 = vmatpush1.msra.mxu0 0.0
  %241 = vmatprep.subr.mxu0 0.0
  %242 = vmatpush1.msra.mxu0 0.0
  %243 = vmatprep.subr.mxu0 0.0
  %244 = vmatpush1.msra.mxu0 0.0
  %245 = vmatprep.subr.mxu0 0.0
  %246 = vmatpush1.msra.mxu0 0.0
  %247 = vmatprep.subr.mxu0 0.0
  %248 = vmatpush1.msra.mxu0 0.0
  %249 = vmatprep.subr.mxu0 0.0
  %250 = vmatpush1.msra.mxu0 0.0
  %251 = vmatprep.mubr.f32.mxu0 0.0
  %252 = vmatmul.mubr.f32.gmra.mrb[0].mxu0 %v185
  %v253 = vpop.f32.mrb[0].mxu0
  %v254 = vadd.f32 0.0, %v253
  %v255 = vpop.f32.mrb[0].mxu0
  %256 = vdwg.mxu0
  %v259 = vrot.slane %v105, 7
  %v260 = vsel %vm58, %v259, %v104
  %v261 = vsel %vm36, %v260, 0
  %263 = vmatprep.subr.mxu0 0.0
  %264 = vmatpush1.msra.mxu0 %v173
  %265 = vmatprep.subr.mxu0 0.0
  %266 = vmatpush1.msra.mxu0 %v174
  %267 = vmatprep.subr.mxu0 0.0
  %268 = vmatpush1.msra.mxu0 %v175
  %269 = vmatprep.subr.mxu0 0.0
  %270 = vmatpush1.msra.mxu0 %v176
  %271 = vmatprep.subr.mxu0 0.0
  %272 = vmatpush1.msra.mxu0 0.0
  %273 = vmatprep.subr.mxu0 0.0
  %274 = vmatpush1.msra.mxu0 0.0
  %275 = vmatprep.subr.mxu0 0.0
  %276 = vmatpush1.msra.mxu0 0.0
  %277 = vmatprep.subr.mxu0 0.0
  %278 = vmatpush1.msra.mxu0 0.0
  %279 = vmatprep.subr.mxu0 0.0
  %280 = vmatpush1.msra.mxu0 0.0
  %281 = vmatprep.subr.mxu0 0.0
  %282 = vmatpush1.msra.mxu0 0.0
  %283 = vmatprep.subr.mxu0 0.0
  %284 = vmatpush1.msra.mxu0 0.0
  %285 = vmatprep.subr.mxu0 0.0
  %286 = vmatpush1.msra.mxu0 0.0
  %287 = vmatprep.subr.mxu0 0.0
  %288 = vmatpush1.msra.mxu0 0.0
  %289 = vmatprep.subr.mxu0 0.0
  %290 = vmatpush1.msra.mxu0 0.0
  %291 = vmatprep.subr.mxu0 0.0
  %292 = vmatpush1.msra.mxu0 0.0
  %293 = vmatprep.subr.mxu0 0.0
  %294 = vmatpush1.msra.mxu0 0.0
  %295 = vmatprep.subr.mxu0 0.0
  %296 = vmatpush1.msra.mxu0 0.0
  %297 = vmatprep.subr.mxu0 0.0
  %298 = vmatpush1.msra.mxu0 0.0
  %299 = vmatprep.subr.mxu0 0.0
  %300 = vmatpush1.msra.mxu0 0.0
  %301 = vmatprep.subr.mxu0 0.0
  %302 = vmatpush1.msra.mxu0 0.0
  %303 = vmatprep.subr.mxu0 0.0
  %304 = vmatpush1.msra.mxu0 0.0
  %305 = vmatprep.subr.mxu0 0.0
  %306 = vmatpush1.msra.mxu0 0.0
  %307 = vmatprep.subr.mxu0 0.0
  %308 = vmatpush1.msra.mxu0 0.0
  %309 = vmatprep.subr.mxu0 0.0
  %310 = vmatpush1.msra.mxu0 0.0
  %311 = vmatprep.subr.mxu0 0.0
  %312 = vmatpush1.msra.mxu0 0.0
  %313 = vmatprep.subr.mxu0 0.0
  %314 = vmatpush1.msra.mxu0 0.0
  %315 = vmatprep.subr.mxu0 0.0
  %316 = vmatpush1.msra.mxu0 0.0
  %317 = vmatprep.subr.mxu0 0.0
  %318 = vmatpush1.msra.mxu0 0.0
  %319 = vmatprep.subr.mxu0 0.0
  %320 = vmatpush1.msra.mxu0 0.0
  %321 = vmatprep.subr.mxu0 0.0
  %322 = vmatpush1.msra.mxu0 0.0
  %323 = vmatprep.subr.mxu0 0.0
  %324 = vmatpush1.msra.mxu0 0.0
  %325 = vmatprep.subr.mxu0 0.0
  %326 = vmatpush1.msra.mxu0 0.0
  %327 = vmatprep.mubr.f32.mxu0 0.0
  %328 = vmatmul.mubr.f32.gmra.mrb[0].mxu0 %v261
  %v329 = vpop.f32.mrb[0].mxu0
  %v330 = vadd.f32 %v254, %v329
  %v331 = vpop.f32.mrb[0].mxu0
  %332 = vdwg.mxu0
  %v333 = vld [vmem:[%s7 + $0x1] sm:$0x1]
  %v334 = vlaneseq
  %v335 = vshrl.u32 %v334, 7
  %v336 = vsub.s32 0, %v335
  %v337 = vrot.slane %v333, %v336
  %v338 = vadd.f32 %v330, %v337
  %v339 = vld [vmem:[%s3] sm:$0x3]
  %v340 = vld [vmem:[%s4] sm:$0xff]
  %v341 = vld [vmem:[%s4 + $0x8] sm:$0xff]
  %v342 = vld [vmem:[%s4 + $0x10] sm:$0xff]
  %v343 = vld [vmem:[%s4 + $0x18] sm:$0xff]
  %v344 = vld [vmem:[%s4 + $0x20] sm:$0xff]
  %v345 = vld [vmem:[%s4 + $0x28] sm:$0xff]
  %v346 = vld [vmem:[%s4 + $0x30] sm:$0xff]
  %v347 = vld [vmem:[%s4 + $0x38] sm:$0xff]
  %v348 = vld [vmem:[%s4 + $0x40] sm:$0xff]
  %v349 = vld [vmem:[%s4 + $0x48] sm:$0xff]
  %v350 = vld [vmem:[%s4 + $0x50] sm:$0xff]
  %v351 = vld [vmem:[%s4 + $0x58] sm:$0xff]
  %v352 = vld [vmem:[%s4 + $0x60] sm:$0xff]
  %v353 = vld [vmem:[%s4 + $0x68] sm:$0xff]
  %v354 = vld [vmem:[%s4 + $0x70] sm:$0xff]
  %v355 = vld [vmem:[%s4 + $0x78] sm:$0xff]
  %v356 = vld [vmem:[%s7] sm:$0x1]
  %v357 = vlaneseq
  %v358 = vshrl.u32 %v357, 7
  %v359 = vsub.s32 0, %v358
  %v360 = vrot.slane %v356, %v359
  %361 = vmatprep.subr.mxu0 0.0
  %362 = vmatpush1.msra.mxu0 %v340
  %363 = vmatprep.subr.mxu0 0.0
  %364 = vmatpush1.msra.mxu0 %v341
  %365 = vmatprep.subr.mxu0 0.0
  %366 = vmatpush1.msra.mxu0 %v342
  %367 = vmatprep.subr.mxu0 0.0
  %368 = vmatpush1.msra.mxu0 %v343
  %369 = vmatprep.subr.mxu0 0.0
  %370 = vmatpush1.msra.mxu0 %v344
  %371 = vmatprep.subr.mxu0 0.0
  %372 = vmatpush1.msra.mxu0 %v345
  %373 = vmatprep.subr.mxu0 0.0
  %374 = vmatpush1.msra.mxu0 %v346
  %375 = vmatprep.subr.mxu0 0.0
  %376 = vmatpush1.msra.mxu0 %v347
  %377 = vmatprep.subr.mxu0 0.0
  %378 = vmatpush1.msra.mxu0 %v348
  %379 = vmatprep.subr.mxu0 0.0
  %380 = vmatpush1.msra.mxu0 %v349
  %381 = vmatprep.subr.mxu0 0.0
  %382 = vmatpush1.msra.mxu0 %v350
  %383 = vmatprep.subr.mxu0 0.0
  %384 = vmatpush1.msra.mxu0 %v351
  %385 = vmatprep.subr.mxu0 0.0
  %386 = vmatpush1.msra.mxu0 %v352
  %387 = vmatprep.subr.mxu0 0.0
  %388 = vmatpush1.msra.mxu0 %v353
  %389 = vmatprep.subr.mxu0 0.0
  %390 = vmatpush1.msra.mxu0 %v354
  %391 = vmatprep.subr.mxu0 0.0
  %392 = vmatpush1.msra.mxu0 %v355
  %393 = vmatprep.subr.mxu0 0.0
  %394 = vmatpush1.msra.mxu0 0.0
  %395 = vmatprep.subr.mxu0 0.0
  %396 = vmatpush1.msra.mxu0 0.0
  %397 = vmatprep.subr.mxu0 0.0
  %398 = vmatpush1.msra.mxu0 0.0
  %399 = vmatprep.subr.mxu0 0.0
  %400 = vmatpush1.msra.mxu0 0.0
  %401 = vmatprep.subr.mxu0 0.0
  %402 = vmatpush1.msra.mxu0 0.0
  %403 = vmatprep.subr.mxu0 0.0
  %404 = vmatpush1.msra.mxu0 0.0
  %405 = vmatprep.subr.mxu0 0.0
  %406 = vmatpush1.msra.mxu0 0.0
  %407 = vmatprep.subr.mxu0 0.0
  %408 = vmatpush1.msra.mxu0 0.0
  %409 = vmatprep.subr.mxu0 0.0
  %410 = vmatpush1.msra.mxu0 0.0
  %411 = vmatprep.subr.mxu0 0.0
  %412 = vmatpush1.msra.mxu0 0.0
  %413 = vmatprep.subr.mxu0 0.0
  %414 = vmatpush1.msra.mxu0 0.0
  %415 = vmatprep.subr.mxu0 0.0
  %416 = vmatpush1.msra.mxu0 0.0
  %417 = vmatprep.subr.mxu0 0.0
  %418 = vmatpush1.msra.mxu0 0.0
  %419 = vmatprep.subr.mxu0 0.0
  %420 = vmatpush1.msra.mxu0 0.0
  %421 = vmatprep.subr.mxu0 0.0
  %422 = vmatpush1.msra.mxu0 0.0
  %423 = vmatprep.subr.mxu0 0.0
  %424 = vmatpush1.msra.mxu0 0.0
  %425 = vmatprep.mubr.f32.mxu0 0.0
  %426 = vmatmul.mubr.f32.gmra.mrb[0].mxu0 %v339
  %v427 = vpop.f32.mrb[0].mxu0
  %v428 = vadd.f32 %v360, %v427
  %v429 = vpop.f32.mrb[0].mxu0
  %430 = vdwg.mxu0
  %v431 = vld [vmem:[%s5] sm:$0xff]
  %v432 = vld [vmem:[%s5 + $0x8] sm:$0xff]
  %v433 = vld [vmem:[%s5 + $0x10] sm:$0xff]
  %v434 = vld [vmem:[%s5 + $0x18] sm:$0xff]
  %v435 = vld [vmem:[%s5 + $0x20] sm:$0xff]
  %v436 = vld [vmem:[%s5 + $0x28] sm:$0xff]
  %v437 = vld [vmem:[%s5 + $0x30] sm:$0xff]
  %v438 = vld [vmem:[%s5 + $0x38] sm:$0xff]
  %v439 = vld [vmem:[%s8] sm:$0x1]
  %v440 = vlaneseq
  %v441 = vshrl.u32 %v440, 7
  %v442 = vsub.s32 0, %v441
  %v443 = vrot.slane %v439, %v442
  %vm444 = vcmask 523264
  %v446 = vsel %vm444, %v428, 0
  %448 = vmatprep.subr.mxu0 0.0
  %449 = vmatpush1.msra.mxu0 %v431
  %450 = vmatprep.subr.mxu0 0.0
  %451 = vmatpush1.msra.mxu0 %v432
  %452 = vmatprep.subr.mxu0 0.0
  %453 = vmatpush1.msra.mxu0 %v433
  %454 = vmatprep.subr.mxu0 0.0
  %455 = vmatpush1.msra.mxu0 %v434
  %456 = vmatprep.subr.mxu0 0.0
  %457 = vmatpush1.msra.mxu0 %v435
  %458 = vmatprep.subr.mxu0 0.0
  %459 = vmatpush1.msra.mxu0 %v436
  %460 = vmatprep.subr.mxu0 0.0
  %461 = vmatpush1.msra.mxu0 %v437
  %462 = vmatprep.subr.mxu0 0.0
  %463 = vmatpush1.msra.mxu0 %v438
  %464 = vmatprep.subr.mxu0 0.0
  %465 = vmatpush1.msra.mxu0 0.0
  %466 = vmatprep.subr.mxu0 0.0
  %467 = vmatpush1.msra.mxu0 0.0
  %468 = vmatprep.subr.mxu0 0.0
  %469 = vmatpush1.msra.mxu0 0.0
  %470 = vmatprep.subr.mxu0 0.0
  %471 = vmatpush1.msra.mxu0 0.0
  %472 = vmatprep.subr.mxu0 0.0
  %473 = vmatpush1.msra.mxu0 0.0
  %474 = vmatprep.subr.mxu0 0.0
  %475 = vmatpush1.msra.mxu0 0.0
  %476 = vmatprep.subr.mxu0 0.0
  %477 = vmatpush1.msra.mxu0 0.0
  %478 = vmatprep.subr.mxu0 0.0
  %479 = vmatpush1.msra.mxu0 0.0
  %480 = vmatprep.subr.mxu0 0.0
  %481 = vmatpush1.msra.mxu0 0.0
  %482 = vmatprep.subr.mxu0 0.0
  %483 = vmatpush1.msra.mxu0 0.0
  %484 = vmatprep.subr.mxu0 0.0
  %485 = vmatpush1.msra.mxu0 0.0
  %486 = vmatprep.subr.mxu0 0.0
  %487 = vmatpush1.msra.mxu0 0.0
  %488 = vmatprep.subr.mxu0 0.0
  %489 = vmatpush1.msra.mxu0 0.0
  %490 = vmatprep.subr.mxu0 0.0
  %491 = vmatpush1.msra.mxu0 0.0
  %492 = vmatprep.subr.mxu0 0.0
  %493 = vmatpush1.msra.mxu0 0.0
  %494 = vmatprep.subr.mxu0 0.0
  %495 = vmatpush1.msra.mxu0 0.0
  %496 = vmatprep.subr.mxu0 0.0
  %497 = vmatpush1.msra.mxu0 0.0
  %498 = vmatprep.subr.mxu0 0.0
  %499 = vmatpush1.msra.mxu0 0.0
  %500 = vmatprep.subr.mxu0 0.0
  %501 = vmatpush1.msra.mxu0 0.0
  %502 = vmatprep.subr.mxu0 0.0
  %503 = vmatpush1.msra.mxu0 0.0
  %504 = vmatprep.subr.mxu0 0.0
  %505 = vmatpush1.msra.mxu0 0.0
  %506 = vmatprep.subr.mxu0 0.0
  %507 = vmatpush1.msra.mxu0 0.0
  %508 = vmatprep.subr.mxu0 0.0
  %509 = vmatpush1.msra.mxu0 0.0
  %510 = vmatprep.subr.mxu0 0.0
  %511 = vmatpush1.msra.mxu0 0.0
  %512 = vmatprep.mubr.f32.mxu0 0.0
  %513 = vmatmul.mubr.f32.gmra.mrb[0].mxu0 %v446
  %v514 = vpop.f32.mrb[0].mxu0
  %v515 = vadd.f32 %v443, %v514
  %v516 = vpop.f32.mrb[0].mxu0
  %517 = vdwg.mxu0
  %v518 = vlaneseq
  %v519 = vand.u32 %v518, 127
  %vm520 = vcmp.lt.s32.totalorder %v519, 20
  %v521 = vstv %s33
  %v522 = vmul.f32 %v521, %v515
  %v523 = vsel %vm520, %v522, %v515
  %v524 = vld [vmem:[%s7 + $0x2] sm:$0x1]
  %v525 = vld [vmem:[%s7 + $0x3] sm:$0x1]
  %vm526 = vcmask 517120
  %v527 = vsel %vm526, %v338, 0.0
  %528 = vadd.xlane.f32.xlu0 %v527
  %v529 = vpop.xlane.xlu0 %528
  %v530 = vrcp.pop 64.0
  %v531 = vmul.f32 %v529, %v530
  %v532 = vsub.f32 %v338, %v531
  %v533 = vmul.f32 %v532, %v532
  %v534 = vsel %vm526, %v533, 0.0
  %535 = vadd.xlane.f32.xlu0 %v534
  %v536 = vpop.xlane.xlu0 %535
  %v537 = vmul.f32 %v536, %v530
  %v538 = vadd.f32 %v537, 1e-05
  %v539 = vrsqrt.pop %v538
  %v540 = vmul.f32 %v532, %v539
  %v541 = vlaneseq
  %v542 = vshrl.u32 %v541, 7
  %v543 = vsub.s32 0, %v542
  %v544 = vrot.slane %v524, %v543
  %v545 = vmul.f32 %v540, %v544
  %v546 = vlaneseq
  %v547 = vshrl.u32 %v546, 7
  %v548 = vsub.s32 0, %v547
  %v549 = vrot.slane %v525, %v548
  %v550 = vadd.f32 %v545, %v549
  %v551 = vld [vmem:[%s4 + $0xc0] sm:$0xff]
  %v552 = vld [vmem:[%s4 + $0xc8] sm:$0xff]
  %v553 = vld [vmem:[%s4 + $0xd0] sm:$0xff]
  %v554 = vld [vmem:[%s4 + $0xd8] sm:$0xff]
  %v555 = vld [vmem:[%s4 + $0xe0] sm:$0xff]
  %v556 = vld [vmem:[%s4 + $0xe8] sm:$0xff]
  %v557 = vld [vmem:[%s4 + $0xf0] sm:$0xff]
  %v558 = vld [vmem:[%s4 + $0xf8] sm:$0xff]
  %v559 = vld [vmem:[%s7 + $0x4] sm:$0x1]
  %v560 = vlaneseq
  %v561 = vshrl.u32 %v560, 7
  %v562 = vsub.s32 0, %v561
  %v563 = vrot.slane %v559, %v562
  %v565 = vsel %vm444, %v550, 0
  %567 = vmatprep.subr.mxu0 0.0
  %568 = vmatpush1.msra.mxu0 %v551
  %569 = vmatprep.subr.mxu0 0.0
  %570 = vmatpush1.msra.mxu0 %v552
  %571 = vmatprep.subr.mxu0 0.0
  %572 = vmatpush1.msra.mxu0 %v553
  %573 = vmatprep.subr.mxu0 0.0
  %574 = vmatpush1.msra.mxu0 %v554
  %575 = vmatprep.subr.mxu0 0.0
  %576 = vmatpush1.msra.mxu0 %v555
  %577 = vmatprep.subr.mxu0 0.0
  %578 = vmatpush1.msra.mxu0 %v556
  %579 = vmatprep.subr.mxu0 0.0
  %580 = vmatpush1.msra.mxu0 %v557
  %581 = vmatprep.subr.mxu0 0.0
  %582 = vmatpush1.msra.mxu0 %v558
  %583 = vmatprep.subr.mxu0 0.0
  %584 = vmatpush1.msra.mxu0 0.0
  %585 = vmatprep.subr.mxu0 0.0
  %586 = vmatpush1.msra.mxu0 0.0
  %587 = vmatprep.subr.mxu0 0.0
  %588 = vmatpush1.msra.mxu0 0.0
  %589 = vmatprep.subr.mxu0 0.0
  %590 = vmatpush1.msra.mxu0 0.0
  %591 = vmatprep.subr.mxu0 0.0
  %592 = vmatpush1.msra.mxu0 0.0
  %593 = vmatprep.subr.mxu0 0.0
  %594 = vmatpush1.msra.mxu0 0.0
  %595 = vmatprep.subr.mxu0 0.0
  %596 = vmatpush1.msra.mxu0 0.0
  %597 = vmatprep.subr.mxu0 0.0
  %598 = vmatpush1.msra.mxu0 0.0
  %599 = vmatprep.subr.mxu0 0.0
  %600 = vmatpush1.msra.mxu0 0.0
  %601 = vmatprep.subr.mxu0 0.0
  %602 = vmatpush1.msra.mxu0 0.0
  %603 = vmatprep.subr.mxu0 0.0
  %604 = vmatpush1.msra.mxu0 0.0
  %605 = vmatprep.subr.mxu0 0.0
  %606 = vmatpush1.msra.mxu0 0.0
  %607 = vmatprep.subr.mxu0 0.0
  %608 = vmatpush1.msra.mxu0 0.0
  %609 = vmatprep.subr.mxu0 0.0
  %610 = vmatpush1.msra.mxu0 0.0
  %611 = vmatprep.subr.mxu0 0.0
  %612 = vmatpush1.msra.mxu0 0.0
  %613 = vmatprep.subr.mxu0 0.0
  %614 = vmatpush1.msra.mxu0 0.0
  %615 = vmatprep.subr.mxu0 0.0
  %616 = vmatpush1.msra.mxu0 0.0
  %617 = vmatprep.subr.mxu0 0.0
  %618 = vmatpush1.msra.mxu0 0.0
  %619 = vmatprep.subr.mxu0 0.0
  %620 = vmatpush1.msra.mxu0 0.0
  %621 = vmatprep.subr.mxu0 0.0
  %622 = vmatpush1.msra.mxu0 0.0
  %623 = vmatprep.subr.mxu0 0.0
  %624 = vmatpush1.msra.mxu0 0.0
  %625 = vmatprep.subr.mxu0 0.0
  %626 = vmatpush1.msra.mxu0 0.0
  %627 = vmatprep.subr.mxu0 0.0
  %628 = vmatpush1.msra.mxu0 0.0
  %629 = vmatprep.subr.mxu0 0.0
  %630 = vmatpush1.msra.mxu0 0.0
  %631 = vmatprep.mubr.f32.mxu0 0.0
  %632 = vmatmul.mubr.f32.gmra.mrb[0].mxu0 %v565
  %v633 = vpop.f32.mrb[0].mxu0
  %v634 = vadd.f32 %v563, %v633
  %v635 = vpop.f32.mrb[0].mxu0
  %636 = vdwg.mxu0
  %v637 = vmax.f32 %v634, 0.0
  %v638 = vld [vmem:[%s4 + $0x100] sm:$0xff]
  %v639 = vld [vmem:[%s4 + $0x108] sm:$0xff]
  %v640 = vld [vmem:[%s4 + $0x110] sm:$0xff]
  %v641 = vld [vmem:[%s4 + $0x118] sm:$0xff]
  %v642 = vld [vmem:[%s4 + $0x120] sm:$0xff]
  %v643 = vld [vmem:[%s4 + $0x128] sm:$0xff]
  %v644 = vld [vmem:[%s4 + $0x130] sm:$0xff]
  %v645 = vld [vmem:[%s4 + $0x138] sm:$0xff]
  %v646 = vld [vmem:[%s7 + $0x5] sm:$0x1]
  %v647 = vlaneseq
  %v648 = vshrl.u32 %v647, 7
  %v649 = vsub.s32 0, %v648
  %v650 = vrot.slane %v646, %v649
  %v652 = vsel %vm444, %v637, 0
  %654 = vmatprep.subr.mxu0 0.0
  %655 = vmatpush1.msra.mxu0 %v638
  %656 = vmatprep.subr.mxu0 0.0
  %657 = vmatpush1.msra.mxu0 %v639
  %658 = vmatprep.subr.mxu0 0.0
  %659 = vmatpush1.msra.mxu0 %v640
  %660 = vmatprep.subr.mxu0 0.0
  %661 = vmatpush1.msra.mxu0 %v641
  %662 = vmatprep.subr.mxu0 0.0
  %663 = vmatpush1.msra.mxu0 %v642
  %664 = vmatprep.subr.mxu0 0.0
  %665 = vmatpush1.msra.mxu0 %v643
  %666 = vmatprep.subr.mxu0 0.0
  %667 = vmatpush1.msra.mxu0 %v644
  %668 = vmatprep.subr.mxu0 0.0
  %669 = vmatpush1.msra.mxu0 %v645
  %670 = vmatprep.subr.mxu0 0.0
  %671 = vmatpush1.msra.mxu0 0.0
  %672 = vmatprep.subr.mxu0 0.0
  %673 = vmatpush1.msra.mxu0 0.0
  %674 = vmatprep.subr.mxu0 0.0
  %675 = vmatpush1.msra.mxu0 0.0
  %676 = vmatprep.subr.mxu0 0.0
  %677 = vmatpush1.msra.mxu0 0.0
  %678 = vmatprep.subr.mxu0 0.0
  %679 = vmatpush1.msra.mxu0 0.0
  %680 = vmatprep.subr.mxu0 0.0
  %681 = vmatpush1.msra.mxu0 0.0
  %682 = vmatprep.subr.mxu0 0.0
  %683 = vmatpush1.msra.mxu0 0.0
  %684 = vmatprep.subr.mxu0 0.0
  %685 = vmatpush1.msra.mxu0 0.0
  %686 = vmatprep.subr.mxu0 0.0
  %687 = vmatpush1.msra.mxu0 0.0
  %688 = vmatprep.subr.mxu0 0.0
  %689 = vmatpush1.msra.mxu0 0.0
  %690 = vmatprep.subr.mxu0 0.0
  %691 = vmatpush1.msra.mxu0 0.0
  %692 = vmatprep.subr.mxu0 0.0
  %693 = vmatpush1.msra.mxu0 0.0
  %694 = vmatprep.subr.mxu0 0.0
  %695 = vmatpush1.msra.mxu0 0.0
  %696 = vmatprep.subr.mxu0 0.0
  %697 = vmatpush1.msra.mxu0 0.0
  %698 = vmatprep.subr.mxu0 0.0
  %699 = vmatpush1.msra.mxu0 0.0
  %700 = vmatprep.subr.mxu0 0.0
  %701 = vmatpush1.msra.mxu0 0.0
  %702 = vmatprep.subr.mxu0 0.0
  %703 = vmatpush1.msra.mxu0 0.0
  %704 = vmatprep.subr.mxu0 0.0
  %705 = vmatpush1.msra.mxu0 0.0
  %706 = vmatprep.subr.mxu0 0.0
  %707 = vmatpush1.msra.mxu0 0.0
  %708 = vmatprep.subr.mxu0 0.0
  %709 = vmatpush1.msra.mxu0 0.0
  %710 = vmatprep.subr.mxu0 0.0
  %711 = vmatpush1.msra.mxu0 0.0
  %712 = vmatprep.subr.mxu0 0.0
  %713 = vmatpush1.msra.mxu0 0.0
  %714 = vmatprep.subr.mxu0 0.0
  %715 = vmatpush1.msra.mxu0 0.0
  %716 = vmatprep.subr.mxu0 0.0
  %717 = vmatpush1.msra.mxu0 0.0
  %718 = vmatprep.mubr.f32.mxu0 0.0
  %719 = vmatmul.mubr.f32.gmra.mrb[0].mxu0 %v652
  %v720 = vpop.f32.mrb[0].mxu0
  %v721 = vadd.f32 %v650, %v720
  %v722 = vpop.f32.mrb[0].mxu0
  %723 = vdwg.mxu0
  %v724 = vld [vmem:[%s5 + $0x40] sm:$0xff]
  %v725 = vld [vmem:[%s5 + $0x48] sm:$0xff]
  %v726 = vld [vmem:[%s5 + $0x50] sm:$0xff]
  %v727 = vld [vmem:[%s5 + $0x58] sm:$0xff]
  %v728 = vld [vmem:[%s5 + $0x60] sm:$0xff]
  %v729 = vld [vmem:[%s5 + $0x68] sm:$0xff]
  %v730 = vld [vmem:[%s5 + $0x70] sm:$0xff]
  %v731 = vld [vmem:[%s5 + $0x78] sm:$0xff]
  %v732 = vld [vmem:[%s8 + $0x1] sm:$0x1]
  %v733 = vlaneseq
  %v734 = vshrl.u32 %v733, 7
  %v735 = vsub.s32 0, %v734
  %v736 = vrot.slane %v732, %v735
  %v738 = vsel %vm444, %v721, 0
  %740 = vmatprep.subr.mxu0 0.0
  %741 = vmatpush1.msra.mxu0 %v724
  %742 = vmatprep.subr.mxu0 0.0
  %743 = vmatpush1.msra.mxu0 %v725
  %744 = vmatprep.subr.mxu0 0.0
  %745 = vmatpush1.msra.mxu0 %v726
  %746 = vmatprep.subr.mxu0 0.0
  %747 = vmatpush1.msra.mxu0 %v727
  %748 = vmatprep.subr.mxu0 0.0
  %749 = vmatpush1.msra.mxu0 %v728
  %750 = vmatprep.subr.mxu0 0.0
  %751 = vmatpush1.msra.mxu0 %v729
  %752 = vmatprep.subr.mxu0 0.0
  %753 = vmatpush1.msra.mxu0 %v730
  %754 = vmatprep.subr.mxu0 0.0
  %755 = vmatpush1.msra.mxu0 %v731
  %756 = vmatprep.subr.mxu0 0.0
  %757 = vmatpush1.msra.mxu0 0.0
  %758 = vmatprep.subr.mxu0 0.0
  %759 = vmatpush1.msra.mxu0 0.0
  %760 = vmatprep.subr.mxu0 0.0
  %761 = vmatpush1.msra.mxu0 0.0
  %762 = vmatprep.subr.mxu0 0.0
  %763 = vmatpush1.msra.mxu0 0.0
  %764 = vmatprep.subr.mxu0 0.0
  %765 = vmatpush1.msra.mxu0 0.0
  %766 = vmatprep.subr.mxu0 0.0
  %767 = vmatpush1.msra.mxu0 0.0
  %768 = vmatprep.subr.mxu0 0.0
  %769 = vmatpush1.msra.mxu0 0.0
  %770 = vmatprep.subr.mxu0 0.0
  %771 = vmatpush1.msra.mxu0 0.0
  %772 = vmatprep.subr.mxu0 0.0
  %773 = vmatpush1.msra.mxu0 0.0
  %774 = vmatprep.subr.mxu0 0.0
  %775 = vmatpush1.msra.mxu0 0.0
  %776 = vmatprep.subr.mxu0 0.0
  %777 = vmatpush1.msra.mxu0 0.0
  %778 = vmatprep.subr.mxu0 0.0
  %779 = vmatpush1.msra.mxu0 0.0
  %780 = vmatprep.subr.mxu0 0.0
  %781 = vmatpush1.msra.mxu0 0.0
  %782 = vmatprep.subr.mxu0 0.0
  %783 = vmatpush1.msra.mxu0 0.0
  %784 = vmatprep.subr.mxu0 0.0
  %785 = vmatpush1.msra.mxu0 0.0
  %786 = vmatprep.subr.mxu0 0.0
  %787 = vmatpush1.msra.mxu0 0.0
  %788 = vmatprep.subr.mxu0 0.0
  %789 = vmatpush1.msra.mxu0 0.0
  %790 = vmatprep.subr.mxu0 0.0
  %791 = vmatpush1.msra.mxu0 0.0
  %792 = vmatprep.subr.mxu0 0.0
  %793 = vmatpush1.msra.mxu0 0.0
  %794 = vmatprep.subr.mxu0 0.0
  %795 = vmatpush1.msra.mxu0 0.0
  %796 = vmatprep.subr.mxu0 0.0
  %797 = vmatpush1.msra.mxu0 0.0
  %798 = vmatprep.subr.mxu0 0.0
  %799 = vmatpush1.msra.mxu0 0.0
  %800 = vmatprep.subr.mxu0 0.0
  %801 = vmatpush1.msra.mxu0 0.0
  %802 = vmatprep.subr.mxu0 0.0
  %803 = vmatpush1.msra.mxu0 0.0
  %804 = vmatprep.mubr.f32.mxu0 0.0
  %805 = vmatmul.mubr.f32.gmra.mrb[0].mxu0 %v738
  %v806 = vpop.f32.mrb[0].mxu0
  %v807 = vadd.f32 %v736, %v806
  %v808 = vpop.f32.mrb[0].mxu0
  %809 = vdwg.mxu0
  %v810 = vld [vmem:[%s4 + $0x140] sm:$0xff]
  %v811 = vld [vmem:[%s4 + $0x148] sm:$0xff]
  %v812 = vld [vmem:[%s4 + $0x150] sm:$0xff]
  %v813 = vld [vmem:[%s4 + $0x158] sm:$0xff]
  %v814 = vld [vmem:[%s4 + $0x160] sm:$0xff]
  %v815 = vld [vmem:[%s4 + $0x168] sm:$0xff]
  %v816 = vld [vmem:[%s4 + $0x170] sm:$0xff]
  %v817 = vld [vmem:[%s4 + $0x178] sm:$0xff]
  %v818 = vld [vmem:[%s7 + $0x6] sm:$0x1]
  %v819 = vlaneseq
  %v820 = vshrl.u32 %v819, 7
  %v821 = vsub.s32 0, %v820
  %v822 = vrot.slane %v818, %v821
  %823 = vmatprep.subr.mxu0 0.0
  %824 = vmatpush1.msra.mxu0 %v810
  %825 = vmatprep.subr.mxu0 0.0
  %826 = vmatpush1.msra.mxu0 %v811
  %827 = vmatprep.subr.mxu0 0.0
  %828 = vmatpush1.msra.mxu0 %v812
  %829 = vmatprep.subr.mxu0 0.0
  %830 = vmatpush1.msra.mxu0 %v813
  %831 = vmatprep.subr.mxu0 0.0
  %832 = vmatpush1.msra.mxu0 %v814
  %833 = vmatprep.subr.mxu0 0.0
  %834 = vmatpush1.msra.mxu0 %v815
  %835 = vmatprep.subr.mxu0 0.0
  %836 = vmatpush1.msra.mxu0 %v816
  %837 = vmatprep.subr.mxu0 0.0
  %838 = vmatpush1.msra.mxu0 %v817
  %839 = vmatprep.subr.mxu0 0.0
  %840 = vmatpush1.msra.mxu0 0.0
  %841 = vmatprep.subr.mxu0 0.0
  %842 = vmatpush1.msra.mxu0 0.0
  %843 = vmatprep.subr.mxu0 0.0
  %844 = vmatpush1.msra.mxu0 0.0
  %845 = vmatprep.subr.mxu0 0.0
  %846 = vmatpush1.msra.mxu0 0.0
  %847 = vmatprep.subr.mxu0 0.0
  %848 = vmatpush1.msra.mxu0 0.0
  %849 = vmatprep.subr.mxu0 0.0
  %850 = vmatpush1.msra.mxu0 0.0
  %851 = vmatprep.subr.mxu0 0.0
  %852 = vmatpush1.msra.mxu0 0.0
  %853 = vmatprep.subr.mxu0 0.0
  %854 = vmatpush1.msra.mxu0 0.0
  %855 = vmatprep.subr.mxu0 0.0
  %856 = vmatpush1.msra.mxu0 0.0
  %857 = vmatprep.subr.mxu0 0.0
  %858 = vmatpush1.msra.mxu0 0.0
  %859 = vmatprep.subr.mxu0 0.0
  %860 = vmatpush1.msra.mxu0 0.0
  %861 = vmatprep.subr.mxu0 0.0
  %862 = vmatpush1.msra.mxu0 0.0
  %863 = vmatprep.subr.mxu0 0.0
  %864 = vmatpush1.msra.mxu0 0.0
  %865 = vmatprep.subr.mxu0 0.0
  %866 = vmatpush1.msra.mxu0 0.0
  %867 = vmatprep.subr.mxu0 0.0
  %868 = vmatpush1.msra.mxu0 0.0
  %869 = vmatprep.subr.mxu0 0.0
  %870 = vmatpush1.msra.mxu0 0.0
  %871 = vmatprep.subr.mxu0 0.0
  %872 = vmatpush1.msra.mxu0 0.0
  %873 = vmatprep.subr.mxu0 0.0
  %874 = vmatpush1.msra.mxu0 0.0
  %875 = vmatprep.subr.mxu0 0.0
  %876 = vmatpush1.msra.mxu0 0.0
  %877 = vmatprep.subr.mxu0 0.0
  %878 = vmatpush1.msra.mxu0 0.0
  %879 = vmatprep.subr.mxu0 0.0
  %880 = vmatpush1.msra.mxu0 0.0
  %881 = vmatprep.subr.mxu0 0.0
  %882 = vmatpush1.msra.mxu0 0.0
  %883 = vmatprep.subr.mxu0 0.0
  %884 = vmatpush1.msra.mxu0 0.0
  %885 = vmatprep.subr.mxu0 0.0
  %886 = vmatpush1.msra.mxu0 0.0
  %887 = vmatprep.mubr.f32.mxu0 0.0
  %888 = vmatmul.mubr.f32.gmra.mrb[0].mxu0 %v446
  %v889 = vpop.f32.mrb[0].mxu0
  %v890 = vadd.f32 %v822, %v889
  %v891 = vpop.f32.mrb[0].mxu0
  %892 = vdwg.mxu0
  %v893 = vld [vmem:[%s7 + $0x7] sm:$0x1]
  %v894 = vlaneseq
  %v895 = vshrl.u32 %v894, 7
  %v896 = vsub.s32 0, %v895
  %v897 = vrot.slane %v893, %v896
  %v898 = vmul.f32 %v890, %v897
  %v899 = vld [vmem:[%s7 + $0x8] sm:$0x1]
  %v900 = vlaneseq
  %v901 = vshrl.u32 %v900, 7
  %v902 = vsub.s32 0, %v901
  %v903 = vrot.slane %v899, %v902
  %v904 = vadd.f32 %v898, %v903
  %v905 = vmax.f32 %v904, 0.0
  %v906 = vld [vmem:[%s4 + $0x180] sm:$0xff]
  %v907 = vld [vmem:[%s4 + $0x188] sm:$0xff]
  %v908 = vld [vmem:[%s4 + $0x190] sm:$0xff]
  %v909 = vld [vmem:[%s4 + $0x198] sm:$0xff]
  %v910 = vld [vmem:[%s4 + $0x1a0] sm:$0xff]
  %v911 = vld [vmem:[%s4 + $0x1a8] sm:$0xff]
  %v912 = vld [vmem:[%s4 + $0x1b0] sm:$0xff]
  %v913 = vld [vmem:[%s4 + $0x1b8] sm:$0xff]
  %v914 = vld [vmem:[%s7 + $0x9] sm:$0x1]
  %v915 = vlaneseq
  %v916 = vshrl.u32 %v915, 7
  %v917 = vsub.s32 0, %v916
  %v918 = vrot.slane %v914, %v917
  %v920 = vsel %vm444, %v905, 0
  %922 = vmatprep.subr.mxu0 0.0
  %923 = vmatpush1.msra.mxu0 %v906
  %924 = vmatprep.subr.mxu0 0.0
  %925 = vmatpush1.msra.mxu0 %v907
  %926 = vmatprep.subr.mxu0 0.0
  %927 = vmatpush1.msra.mxu0 %v908
  %928 = vmatprep.subr.mxu0 0.0
  %929 = vmatpush1.msra.mxu0 %v909
  %930 = vmatprep.subr.mxu0 0.0
  %931 = vmatpush1.msra.mxu0 %v910
  %932 = vmatprep.subr.mxu0 0.0
  %933 = vmatpush1.msra.mxu0 %v911
  %934 = vmatprep.subr.mxu0 0.0
  %935 = vmatpush1.msra.mxu0 %v912
  %936 = vmatprep.subr.mxu0 0.0
  %937 = vmatpush1.msra.mxu0 %v913
  %938 = vmatprep.subr.mxu0 0.0
  %939 = vmatpush1.msra.mxu0 0.0
  %940 = vmatprep.subr.mxu0 0.0
  %941 = vmatpush1.msra.mxu0 0.0
  %942 = vmatprep.subr.mxu0 0.0
  %943 = vmatpush1.msra.mxu0 0.0
  %944 = vmatprep.subr.mxu0 0.0
  %945 = vmatpush1.msra.mxu0 0.0
  %946 = vmatprep.subr.mxu0 0.0
  %947 = vmatpush1.msra.mxu0 0.0
  %948 = vmatprep.subr.mxu0 0.0
  %949 = vmatpush1.msra.mxu0 0.0
  %950 = vmatprep.subr.mxu0 0.0
  %951 = vmatpush1.msra.mxu0 0.0
  %952 = vmatprep.subr.mxu0 0.0
  %953 = vmatpush1.msra.mxu0 0.0
  %954 = vmatprep.subr.mxu0 0.0
  %955 = vmatpush1.msra.mxu0 0.0
  %956 = vmatprep.subr.mxu0 0.0
  %957 = vmatpush1.msra.mxu0 0.0
  %958 = vmatprep.subr.mxu0 0.0
  %959 = vmatpush1.msra.mxu0 0.0
  %960 = vmatprep.subr.mxu0 0.0
  %961 = vmatpush1.msra.mxu0 0.0
  %962 = vmatprep.subr.mxu0 0.0
  %963 = vmatpush1.msra.mxu0 0.0
  %964 = vmatprep.subr.mxu0 0.0
  %965 = vmatpush1.msra.mxu0 0.0
  %966 = vmatprep.subr.mxu0 0.0
  %967 = vmatpush1.msra.mxu0 0.0
  %968 = vmatprep.subr.mxu0 0.0
  %969 = vmatpush1.msra.mxu0 0.0
  %970 = vmatprep.subr.mxu0 0.0
  %971 = vmatpush1.msra.mxu0 0.0
  %972 = vmatprep.subr.mxu0 0.0
  %973 = vmatpush1.msra.mxu0 0.0
  %974 = vmatprep.subr.mxu0 0.0
  %975 = vmatpush1.msra.mxu0 0.0
  %976 = vmatprep.subr.mxu0 0.0
  %977 = vmatpush1.msra.mxu0 0.0
  %978 = vmatprep.subr.mxu0 0.0
  %979 = vmatpush1.msra.mxu0 0.0
  %980 = vmatprep.subr.mxu0 0.0
  %981 = vmatpush1.msra.mxu0 0.0
  %982 = vmatprep.subr.mxu0 0.0
  %983 = vmatpush1.msra.mxu0 0.0
  %984 = vmatprep.subr.mxu0 0.0
  %985 = vmatpush1.msra.mxu0 0.0
  %986 = vmatprep.mubr.f32.mxu0 0.0
  %987 = vmatmul.mubr.f32.gmra.mrb[0].mxu0 %v920
  %v988 = vpop.f32.mrb[0].mxu0
  %v989 = vadd.f32 %v918, %v988
  %v990 = vpop.f32.mrb[0].mxu0
  %991 = vdwg.mxu0
  %v992 = vld [vmem:[%s5 + $0x80] sm:$0xff]
  %v993 = vld [vmem:[%s5 + $0x88] sm:$0xff]
  %v994 = vld [vmem:[%s5 + $0x90] sm:$0xff]
  %v995 = vld [vmem:[%s5 + $0x98] sm:$0xff]
  %v996 = vld [vmem:[%s5 + $0xa0] sm:$0xff]
  %v997 = vld [vmem:[%s5 + $0xa8] sm:$0xff]
  %v998 = vld [vmem:[%s5 + $0xb0] sm:$0xff]
  %v999 = vld [vmem:[%s5 + $0xb8] sm:$0xff]
  %v1000 = vld [vmem:[%s5 + $0xc0] sm:$0x1]
  %v1001 = vld [vmem:[%s8 + $0x2] sm:$0x1]
  %v1002 = vlaneseq
  %v1003 = vshrl.u32 %v1002, 7
  %v1004 = vsub.s32 0, %v1003
  %v1005 = vrot.slane %v1001, %v1004
  %vm1006 = vcmask 531456
  %v1008 = vsel %vm1006, %v523, 0
  %vm1010 = vcmask 1040384
  %v1012 = vsel %vm1010, %v1000, 0
  %1014 = vmatprep.subr.mxu0 0.0
  %1015 = vmatpush1.msra.mxu0 %v992
  %1016 = vmatprep.subr.mxu0 0.0
  %1017 = vmatpush1.msra.mxu0 %v993
  %1018 = vmatprep.subr.mxu0 0.0
  %1019 = vmatpush1.msra.mxu0 %v994
  %1020 = vmatprep.subr.mxu0 0.0
  %1021 = vmatpush1.msra.mxu0 %v995
  %1022 = vmatprep.subr.mxu0 0.0
  %1023 = vmatpush1.msra.mxu0 %v996
  %1024 = vmatprep.subr.mxu0 0.0
  %1025 = vmatpush1.msra.mxu0 %v997
  %1026 = vmatprep.subr.mxu0 0.0
  %1027 = vmatpush1.msra.mxu0 %v998
  %1028 = vmatprep.subr.mxu0 0.0
  %1029 = vmatpush1.msra.mxu0 %v999
  %1030 = vmatprep.subr.mxu0 0.0
  %1031 = vmatpush1.msra.mxu0 %v1012
  %1032 = vmatprep.subr.mxu0 0.0
  %1033 = vmatpush1.msra.mxu0 0.0
  %1034 = vmatprep.subr.mxu0 0.0
  %1035 = vmatpush1.msra.mxu0 0.0
  %1036 = vmatprep.subr.mxu0 0.0
  %1037 = vmatpush1.msra.mxu0 0.0
  %1038 = vmatprep.subr.mxu0 0.0
  %1039 = vmatpush1.msra.mxu0 0.0
  %1040 = vmatprep.subr.mxu0 0.0
  %1041 = vmatpush1.msra.mxu0 0.0
  %1042 = vmatprep.subr.mxu0 0.0
  %1043 = vmatpush1.msra.mxu0 0.0
  %1044 = vmatprep.subr.mxu0 0.0
  %1045 = vmatpush1.msra.mxu0 0.0
  %1046 = vmatprep.subr.mxu0 0.0
  %1047 = vmatpush1.msra.mxu0 0.0
  %1048 = vmatprep.subr.mxu0 0.0
  %1049 = vmatpush1.msra.mxu0 0.0
  %1050 = vmatprep.subr.mxu0 0.0
  %1051 = vmatpush1.msra.mxu0 0.0
  %1052 = vmatprep.subr.mxu0 0.0
  %1053 = vmatpush1.msra.mxu0 0.0
  %1054 = vmatprep.subr.mxu0 0.0
  %1055 = vmatpush1.msra.mxu0 0.0
  %1056 = vmatprep.subr.mxu0 0.0
  %1057 = vmatpush1.msra.mxu0 0.0
  %1058 = vmatprep.subr.mxu0 0.0
  %1059 = vmatpush1.msra.mxu0 0.0
  %1060 = vmatprep.subr.mxu0 0.0
  %1061 = vmatpush1.msra.mxu0 0.0
  %1062 = vmatprep.subr.mxu0 0.0
  %1063 = vmatpush1.msra.mxu0 0.0
  %1064 = vmatprep.subr.mxu0 0.0
  %1065 = vmatpush1.msra.mxu0 0.0
  %1066 = vmatprep.subr.mxu0 0.0
  %1067 = vmatpush1.msra.mxu0 0.0
  %1068 = vmatprep.subr.mxu0 0.0
  %1069 = vmatpush1.msra.mxu0 0.0
  %1070 = vmatprep.subr.mxu0 0.0
  %1071 = vmatpush1.msra.mxu0 0.0
  %1072 = vmatprep.subr.mxu0 0.0
  %1073 = vmatpush1.msra.mxu0 0.0
  %1074 = vmatprep.subr.mxu0 0.0
  %1075 = vmatpush1.msra.mxu0 0.0
  %1076 = vmatprep.subr.mxu0 0.0
  %1077 = vmatpush1.msra.mxu0 0.0
  %1078 = vmatprep.mubr.f32.mxu0 0.0
  %1079 = vmatmul.mubr.f32.gmra.mrb[0].mxu0 %v1008
  %v1080 = vpop.f32.mrb[0].mxu0
  %v1081 = vadd.f32 %v1005, %v1080
  %v1082 = vpop.f32.mrb[0].mxu0
  %1083 = vdwg.mxu0
  %v1084 = vld [vmem:[%s8 + $0x3] sm:$0x1]
  %v1085 = vlaneseq
  %v1086 = vshrl.u32 %v1085, 7
  %v1087 = vsub.s32 0, %v1086
  %v1088 = vrot.slane %v1084, %v1087
  %v1089 = vmul.f32 %v1081, %v1088
  %v1090 = vld [vmem:[%s8 + $0x4] sm:$0x1]
  %v1091 = vlaneseq
  %v1092 = vshrl.u32 %v1091, 7
  %v1093 = vsub.s32 0, %v1092
  %v1094 = vrot.slane %v1090, %v1093
  %v1095 = vadd.f32 %v1089, %v1094
  %v1096 = vmax.f32 %v1095, 0.0
  %v1097 = vld [vmem:[%s5 + $0xc8] sm:$0xff]
  %v1098 = vld [vmem:[%s5 + $0xd0] sm:$0xff]
  %v1099 = vld [vmem:[%s5 + $0xd8] sm:$0xff]
  %v1100 = vld [vmem:[%s5 + $0xe0] sm:$0xff]
  %v1101 = vld [vmem:[%s5 + $0xe8] sm:$0xff]
  %v1102 = vld [vmem:[%s5 + $0xf0] sm:$0xff]
  %v1103 = vld [vmem:[%s5 + $0xf8] sm:$0xff]
  %v1104 = vld [vmem:[%s5 + $0x100] sm:$0xff]
  %v1105 = vld [vmem:[%s5 + $0x108] sm:$0x1]
  %v1106 = vld [vmem:[%s8 + $0x5] sm:$0x1]
  %v1107 = vlaneseq
  %v1108 = vshrl.u32 %v1107, 7
  %v1109 = vsub.s32 0, %v1108
  %v1110 = vrot.slane %v1106, %v1109
  %v1112 = vsel %vm1006, %v1096, 0
  %v1115 = vsel %vm1010, %v1105, 0
  %1117 = vmatprep.subr.mxu0 0.0
  %1118 = vmatpush1.msra.mxu0 %v1097
  %1119 = vmatprep.subr.mxu0 0.0
  %1120 = vmatpush1.msra.mxu0 %v1098
  %1121 = vmatprep.subr.mxu0 0.0
  %1122 = vmatpush1.msra.mxu0 %v1099
  %1123 = vmatprep.subr.mxu0 0.0
  %1124 = vmatpush1.msra.mxu0 %v1100
  %1125 = vmatprep.subr.mxu0 0.0
  %1126 = vmatpush1.msra.mxu0 %v1101
  %1127 = vmatprep.subr.mxu0 0.0
  %1128 = vmatpush1.msra.mxu0 %v1102
  %1129 = vmatprep.subr.mxu0 0.0
  %1130 = vmatpush1.msra.mxu0 %v1103
  %1131 = vmatprep.subr.mxu0 0.0
  %1132 = vmatpush1.msra.mxu0 %v1104
  %1133 = vmatprep.subr.mxu0 0.0
  %1134 = vmatpush1.msra.mxu0 %v1115
  %1135 = vmatprep.subr.mxu0 0.0
  %1136 = vmatpush1.msra.mxu0 0.0
  %1137 = vmatprep.subr.mxu0 0.0
  %1138 = vmatpush1.msra.mxu0 0.0
  %1139 = vmatprep.subr.mxu0 0.0
  %1140 = vmatpush1.msra.mxu0 0.0
  %1141 = vmatprep.subr.mxu0 0.0
  %1142 = vmatpush1.msra.mxu0 0.0
  %1143 = vmatprep.subr.mxu0 0.0
  %1144 = vmatpush1.msra.mxu0 0.0
  %1145 = vmatprep.subr.mxu0 0.0
  %1146 = vmatpush1.msra.mxu0 0.0
  %1147 = vmatprep.subr.mxu0 0.0
  %1148 = vmatpush1.msra.mxu0 0.0
  %1149 = vmatprep.subr.mxu0 0.0
  %1150 = vmatpush1.msra.mxu0 0.0
  %1151 = vmatprep.subr.mxu0 0.0
  %1152 = vmatpush1.msra.mxu0 0.0
  %1153 = vmatprep.subr.mxu0 0.0
  %1154 = vmatpush1.msra.mxu0 0.0
  %1155 = vmatprep.subr.mxu0 0.0
  %1156 = vmatpush1.msra.mxu0 0.0
  %1157 = vmatprep.subr.mxu0 0.0
  %1158 = vmatpush1.msra.mxu0 0.0
  %1159 = vmatprep.subr.mxu0 0.0
  %1160 = vmatpush1.msra.mxu0 0.0
  %1161 = vmatprep.subr.mxu0 0.0
  %1162 = vmatpush1.msra.mxu0 0.0
  %1163 = vmatprep.subr.mxu0 0.0
  %1164 = vmatpush1.msra.mxu0 0.0
  %1165 = vmatprep.subr.mxu0 0.0
  %1166 = vmatpush1.msra.mxu0 0.0
  %1167 = vmatprep.subr.mxu0 0.0
  %1168 = vmatpush1.msra.mxu0 0.0
  %1169 = vmatprep.subr.mxu0 0.0
  %1170 = vmatpush1.msra.mxu0 0.0
  %1171 = vmatprep.subr.mxu0 0.0
  %1172 = vmatpush1.msra.mxu0 0.0
  %1173 = vmatprep.subr.mxu0 0.0
  %1174 = vmatpush1.msra.mxu0 0.0
  %1175 = vmatprep.subr.mxu0 0.0
  %1176 = vmatpush1.msra.mxu0 0.0
  %1177 = vmatprep.subr.mxu0 0.0
  %1178 = vmatpush1.msra.mxu0 0.0
  %1179 = vmatprep.subr.mxu0 0.0
  %1180 = vmatpush1.msra.mxu0 0.0
  %1181 = vmatprep.mubr.f32.mxu0 0.0
  %1182 = vmatmul.mubr.f32.gmra.mrb[0].mxu0 %v1112
  %v1183 = vpop.f32.mrb[0].mxu0
  %v1184 = vadd.f32 %v1110, %v1183
  %v1185 = vpop.f32.mrb[0].mxu0
  %1186 = vdwg.mxu0
  %1187 = vst [vmem:[%s9] sm:$0xff] 0.0
  %1188 = vst [vmem:[%s9 + $0x8] sm:$0xff] 0.0
  %1189 = vst [vmem:[%s9 + $0x10] sm:$0x3] 0.0
  %v1190 = vmul.f32 %v428, %v428
  %v1191 = vsel %vm61, %v1190, 0.0
  %1192 = vadd.xlane.f32.xlu0 %v1191
  %v1193 = vpop.xlane.xlu0 %1192
  %v1194 = vrsqrt.pop %v1193
  %v1195 = vmul.f32 %v1193, %v1194
  %vm1196 = vcmp.eq.f32.partialorder %v1193, inf
  %v1197 = vsel %vm1196, %v1193, %v1195
  %vm1198 = vcmp.eq.f32.partialorder %v1193, 0.0
  %v1199 = vand.u32 %v1193, 2147483648
  %v1200 = vsel %vm1198, %v1199, %v1197
  %v1201 = vmax.f32 %v1200, 1e-12
  %v1202 = vrcp.pop %v1201
  %v1203 = vmul.f32 %v428, %v1202
  %1204 = vst.msk [vmem:[%s9] sm:$0x3] %vm61, %v1203
  %v1205 = vmul.f32 %v338, %v338
  %v1206 = vsel %vm61, %v1205, 0.0
  %1207 = vadd.xlane.f32.xlu0 %v1206
  %v1208 = vpop.xlane.xlu0 %1207
  %v1209 = vrsqrt.pop %v1208
  %v1210 = vmul.f32 %v1208, %v1209
  %vm1211 = vcmp.eq.f32.partialorder %v1208, inf
  %v1212 = vsel %vm1211, %v1208, %v1210
  %vm1213 = vcmp.eq.f32.partialorder %v1208, 0.0
  %v1214 = vand.u32 %v1208, 2147483648
  %v1215 = vsel %vm1213, %v1214, %v1212
  %v1216 = vmax.f32 %v1215, 1e-12
  %v1217 = vrcp.pop %v1216
  %v1218 = vmul.f32 %v338, %v1217
  %1219 = vst.msk [vmem:[%s9 + $0x2] sm:$0x3] %vm61, %v1218
  %1221 = vrot.lane.b32.xlu0 %v1190, 96
  %v1222 = vpop.permute.xlu0 %1221
  %v1224 = vsel %vm61, %v1222, 0.0
  %1225 = vadd.xlane.f32.xlu0 %v1224
  %v1226 = vpop.xlane.xlu0 %1225
  %v1227 = vrsqrt.pop %v1226
  %v1228 = vmul.f32 %v1226, %v1227
  %vm1229 = vcmp.eq.f32.partialorder %v1226, inf
  %v1230 = vsel %vm1229, %v1226, %v1228
  %vm1231 = vcmp.eq.f32.partialorder %v1226, 0.0
  %v1232 = vand.u32 %v1226, 2147483648
  %v1233 = vsel %vm1231, %v1232, %v1230
  %v1234 = vmax.f32 %v1233, 1e-12
  %v1235 = vrcp.pop %v1234
  %v1236 = vmul.f32 %v428, %v1235
  %v1239 = vunpack.c.l.s4 1983009808
  %v1240 = vunpack.c.0.s8 %v1239
  %v1241 = vlaneseq
  %v1242 = vshrl.u32 %v1241, 7
  %v1243 = vsub.s32 %v1240, %v1242
  %v1244 = vrot.slane %v1236, %v1243
  %1245 = vrot.lane.b32.xlu0 %v1244, 96
  %v1246 = vpop.permute.xlu0 %1245
  %1248 = vst.msk [vmem:[%s9 + $0x4] sm:$0x3] %vm61, %v1246
  %1250 = vrot.lane.b32.xlu0 %v1205, 96
  %v1251 = vpop.permute.xlu0 %1250
  %v1253 = vsel %vm61, %v1251, 0.0
  %1254 = vadd.xlane.f32.xlu0 %v1253
  %v1255 = vpop.xlane.xlu0 %1254
  %v1256 = vrsqrt.pop %v1255
  %v1257 = vmul.f32 %v1255, %v1256
  %vm1258 = vcmp.eq.f32.partialorder %v1255, inf
  %v1259 = vsel %vm1258, %v1255, %v1257
  %vm1260 = vcmp.eq.f32.partialorder %v1255, 0.0
  %v1261 = vand.u32 %v1255, 2147483648
  %v1262 = vsel %vm1260, %v1261, %v1259
  %v1263 = vmax.f32 %v1262, 1e-12
  %v1264 = vrcp.pop %v1263
  %v1265 = vmul.f32 %v338, %v1264
  %v1268 = vunpack.c.l.s4 1983009808
  %v1269 = vunpack.c.0.s8 %v1268
  %v1270 = vlaneseq
  %v1271 = vshrl.u32 %v1270, 7
  %v1272 = vsub.s32 %v1269, %v1271
  %v1273 = vrot.slane %v1265, %v1272
  %1274 = vrot.lane.b32.xlu0 %v1273, 96
  %v1275 = vpop.permute.xlu0 %1274
  %1277 = vst.msk [vmem:[%s9 + $0x6] sm:$0x3] %vm61, %v1275
  %v1278 = vmul.f32 %v1184, %v1184
  %vm1279 = vcmask 525312
  %v1280 = vsel %vm1279, %v1278, 0.0
  %1281 = vadd.xlane.f32.xlu0 %v1280
  %v1282 = vpop.xlane.xlu0 %1281
  %v1283 = vrsqrt.pop %v1282
  %v1284 = vmul.f32 %v1282, %v1283
  %vm1285 = vcmp.eq.f32.partialorder %v1282, inf
  %v1286 = vsel %vm1285, %v1282, %v1284
  %vm1287 = vcmp.eq.f32.partialorder %v1282, 0.0
  %v1288 = vand.u32 %v1282, 2147483648
  %v1289 = vsel %vm1287, %v1288, %v1286
  %v1290 = vmax.f32 %v1289, 1e-12
  %v1291 = vrcp.pop %v1290
  %v1292 = vmul.f32 %v1184, %v1291
  %1293 = vst.msk [vmem:[%s9 + $0x8] sm:$0x3] %vm1279, %v1292
  %v1294 = vmul.f32 %v807, %v807
  %v1295 = vsel %vm1279, %v1294, 0.0
  %1296 = vadd.xlane.f32.xlu0 %v1295
  %v1297 = vpop.xlane.xlu0 %1296
  %v1298 = vrsqrt.pop %v1297
  %v1299 = vmul.f32 %v1297, %v1298
  %vm1300 = vcmp.eq.f32.partialorder %v1297, inf
  %v1301 = vsel %vm1300, %v1297, %v1299
  %vm1302 = vcmp.eq.f32.partialorder %v1297, 0.0
  %v1303 = vand.u32 %v1297, 2147483648
  %v1304 = vsel %vm1302, %v1303, %v1301
  %v1305 = vmax.f32 %v1304, 1e-12
  %v1306 = vrcp.pop %v1305
  %v1307 = vmul.f32 %v807, %v1306
  %1308 = vst.msk [vmem:[%s9 + $0xa] sm:$0x3] %vm1279, %v1307
  %v1309 = vmul.f32 %v989, %v989
  %v1310 = vsel %vm526, %v1309, 0.0
  %1311 = vadd.xlane.f32.xlu0 %v1310
  %v1312 = vpop.xlane.xlu0 %1311
  %v1313 = vrsqrt.pop %v1312
  %v1314 = vmul.f32 %v1312, %v1313
  %vm1315 = vcmp.eq.f32.partialorder %v1312, inf
  %v1316 = vsel %vm1315, %v1312, %v1314
  %vm1317 = vcmp.eq.f32.partialorder %v1312, 0.0
  %v1318 = vand.u32 %v1312, 2147483648
  %v1319 = vsel %vm1317, %v1318, %v1316
  %v1320 = vmax.f32 %v1319, 1e-12
  %v1321 = vrcp.pop %v1320
  %v1322 = vmul.f32 %v989, %v1321
  %1323 = vst.msk [vmem:[%s9 + $0xc] sm:$0x3] %vm526, %v1322
  %v1324 = vmul.f32 %v721, %v721
  %v1325 = vsel %vm526, %v1324, 0.0
  %1326 = vadd.xlane.f32.xlu0 %v1325
  %v1327 = vpop.xlane.xlu0 %1326
  %v1328 = vrsqrt.pop %v1327
  %v1329 = vmul.f32 %v1327, %v1328
  %vm1330 = vcmp.eq.f32.partialorder %v1327, inf
  %v1331 = vsel %vm1330, %v1327, %v1329
  %vm1332 = vcmp.eq.f32.partialorder %v1327, 0.0
  %v1333 = vand.u32 %v1327, 2147483648
  %v1334 = vsel %vm1332, %v1333, %v1331
  %v1335 = vmax.f32 %v1334, 1e-12
  %v1336 = vrcp.pop %v1335
  %v1337 = vmul.f32 %v721, %v1336
  %1338 = vst.msk [vmem:[%s9 + $0xe] sm:$0x3] %vm526, %v1337
  %1339 = vst.msk [vmem:[%s9 + $0x10] sm:$0x3] %vm1279, %v515
  // Predicated region
  $region38: #{siamese_forward.1} parent=0 // pred_check
    _
  $region39: #{siamese_forward.1} parent=0 // pred_check_branch
    %1341 = sbr.rel (0) target = $region41
  $region40: #{siamese_forward.1} parent=0 // pred_region
    _
  $region41: #{siamese_forward.1} parent=0 // pred_fallthru
    _
  // Predicated region
  $region42: #{siamese_forward.1} parent=0 // pred_check
    _
  $region43: #{siamese_forward.1} parent=0 // pred_check_branch
    %1343 = sbr.rel (0) target = $region45
  $region44: #{siamese_forward.1} parent=0 // pred_region
    _
  $region45: #{siamese_forward.1} parent=0 // pred_fallthru
    _

</llo_original>
